<compile_context>
chip_gen: v7x
topology: tpu7x:2x2x1
jax: 0.10.0
libtpu: 0.0.40
codegen_flags: <defaults>
</compile_context>

<pallas_src>
import math

import numpy as np
import jax
import jax.numpy as jnp
from jax.experimental import pallas as pl
from jax.experimental.pallas import tpu as pltpu


# ----------------------------- device tuning --------------------------------

def device_config():
    """Per-TPU-generation dtypes / block-size / VMEM settings."""
    try:
        kind = jax.devices()[0].device_kind.lower()
    except Exception:
        kind = ""
    if "v7" in kind or "tpu7" in kind:
        return dict(act=jnp.bfloat16, dot=jnp.bfloat16,
                    target_block_lanes=2048, max_block_lanes=4096,
                    vmem_limit_bytes=48 * 1024 * 1024, min_grid_steps=2)
    if "v6" in kind:
        return dict(act=jnp.bfloat16, dot=jnp.bfloat16,
                    target_block_lanes=2048, max_block_lanes=8192,
                    vmem_limit_bytes=64 * 1024 * 1024, min_grid_steps=1)
    if "v5" in kind:
        # v5e VPU/EUP have no bf16 -> keep elementwise math in f32,
        # cast only the matmul operands to bf16 (MXU is bf16-native).
        return dict(act=jnp.float32, dot=jnp.bfloat16,
                    target_block_lanes=2048, max_block_lanes=8192,
                    vmem_limit_bytes=64 * 1024 * 1024, min_grid_steps=1)
    # Unknown generation: conservative all-f32.
    return dict(act=jnp.float32, dot=jnp.float32,
                target_block_lanes=1024, max_block_lanes=4096,
                vmem_limit_bytes=32 * 1024 * 1024, min_grid_steps=1)


# --------------------------------- kernel ----------------------------------

def _make_kernel(L, Lp, act_dtype, dot_dtype):
    """L = real sample length, Lp = padded per-sample lane stride (Lp >= L)."""

    def kernel(x_ref, w1_ref, s1_ref, w2_ref, s2_ref, w3_ref, s3_ref,
               wd_ref, s4_ref, w4_ref, s5_ref, w5_ref, b5_ref, o_ref):
        B = x_ref.shape[1]                                       # block lanes
        x = x_ref[...].astype(act_dtype)                         # (1, B)

        # Per-lane position within its own (padded-stride) sample, built once.
        lane = jax.lax.broadcasted_iota(jnp.int32, (1, B), 1)
        p = lane % Lp
        ge1_1 = p >= 1
        lt1_1 = p < (L - 1)
        # Hoisted (64, B) masks; sublane slices serve narrower channel counts.
        ge1 = jnp.broadcast_to(ge1_1, (64, B))
        lt1 = jnp.broadcast_to(lt1_1, (64, B))
        ge2 = jnp.broadcast_to(p >= 2, (64, B))
        lt2 = jnp.broadcast_to(p < (L - 2), (64, B))
        even = jnp.broadcast_to((p % 2) == 0, (64, B))

        def sd(v, mask, k):      # out[:, p] = v[:, p-k]; zero-pad at sample start
            return jnp.where(mask, pltpu.roll(v, shift=k, axis=1), 0.0)

        def su(v, mask, k):      # out[:, p] = v[:, p+k]; zero-pad at sample end
            return jnp.where(mask, pltpu.roll(v, shift=B - k, axis=1), 0.0)

        def mm(w, v):            # MXU matmul, f32 accumulation
            return jnp.dot(w, v.astype(dot_dtype),
                           preferred_element_type=jnp.float32)

        def conv_bn_relu(v, w_ref, s_ref, mask_d, mask_u, k):
            # 3-tap conv as three accumulating matmuls (no tap-stack concat).
            h = (mm(w_ref[0], sd(v, mask_d, k))
                 + mm(w_ref[1], v)
                 + mm(w_ref[2], su(v, mask_u, k)))
            return jnp.maximum(h + s_ref[...], 0.0).astype(act_dtype)

        # ------------------------------ encoder ------------------------------
        # Conv1d(1, 32, k=3, p=1) + BN + ReLU   (Cin == 1 -> broadcast multiplies)
        a = jnp.maximum(w1_ref[:, 0:1] * sd(x, ge1_1, 1)
                        + w1_ref[:, 1:2] * x
                        + w1_ref[:, 2:3] * su(x, lt1_1, 1)
                        + s1_ref[...], 0.0).astype(act_dtype)    # (32, B)
        # Conv1d(32, 64) + BN + ReLU          (Dropout = identity in eval mode)
        a = conv_bn_relu(a, w2_ref, s2_ref, ge1[:32], lt1[:32], 1)   # (64, B)
        # MaxPool1d(2): pooled value lives at even lanes (odd lanes are unused)
        m = jnp.maximum(a, su(a, lt1, 1))                            # (64, B)
        # Conv1d(64, latent) + BN + ReLU on the pooled sequence (stride-2 taps)
        z = conv_bn_relu(m, w3_ref, s3_ref, ge2, lt2, 2)             # (latent, B)

        # ------------------------------ decoder ------------------------------
        # ConvTranspose1d(latent, 64, k=2, s=2): tap 0 -> even outputs,
        # tap 1 -> odd outputs (shifted down one lane).
        u0 = mm(wd_ref[0], z)                                        # (64, B) f32
        u1 = mm(wd_ref[1], z)                                        # (64, B) f32
        y = jnp.where(even, u0, sd(u1, ge1, 1))
        y = jnp.maximum(y + s4_ref[...], 0.0).astype(act_dtype)      # (64, B)
        # Conv1d(64, 32) + BN + ReLU          (Dropout = identity in eval mode)
        y = conv_bn_relu(y, w4_ref, s5_ref, ge1, lt1, 1)             # (32, B)
        # Conv1d(32, 1): Cout padded to 8 rows for MXU alignment, take row 0.
        out = (mm(w5_ref[0], sd(y, ge1[:32], 1))
               + mm(w5_ref[1], y)
               + mm(w5_ref[2], su(y, lt1[:32], 1)))[0:1, :]          # (1, B)
        o_ref[...] = (out + b5_ref[...]).astype(o_ref.dtype)

    return kernel


# --------------------------------- wrapper ----------------------------------

def conv_autoencoder_1d(x_ncl, kp, *, window_size, cfg=None):
    """x_ncl: (N, 1, L) float32 (PyTorch NCL layout). Returns (N, 1, L) f32."""
    if cfg is None:
        cfg = device_config()
    N, cin, L = x_ncl.shape
    assert cin == 1 and L == window_size
    assert L % 2 == 0, "odd window_size (output_padding=1) not supported"

    # Per-sample lane stride: whole samples per block, multiple of 128 lanes.
    blk_base = (L * 128) // math.gcd(L, 128)
    if blk_base > cfg["max_block_lanes"]:
        # lcm(L, 128) blow-up guard: pad each sample's stride to a 128 multiple.
        Lp = pl.cdiv(L, 128) * 128
        blk_base = Lp
    else:
        Lp = L

    total = N * Lp
    n_base = pl.cdiv(total, blk_base)
    mult = max(1, min(cfg["target_block_lanes"] // blk_base, n_base))
    # Prefer >= min_grid_steps grid steps (megacore split on v7x) when possible.
    if cfg.get("min_grid_steps", 1) > 1 and n_base >= cfg["min_grid_steps"]:
        mult = max(1, min(mult, n_base // cfg["min_grid_steps"]))
    blk = blk_base * mult
    total_pad = pl.cdiv(total, blk) * blk
    grid = (total_pad // blk,)

    x2 = x_ncl.astype(jnp.float32).reshape(N, L)
    if Lp != L:
        x2 = jnp.pad(x2, ((0, 0), (0, Lp - L)))
    x_flat = x2.reshape(total)
    x_flat = jnp.pad(x_flat, (0, total_pad - total)).reshape(1, total_pad)

    params = [kp["w1"], kp["s1"], kp["w2"], kp["s2"], kp["w3"], kp["s3"],
              kp["wd"], kp["s4"], kp["w4"], kp["s5"], kp["w5"], kp["b5"]]

    def full_spec(a):
        nd = a.ndim
        return pl.BlockSpec(a.shape, lambda i, _nd=nd: (0,) * _nd)

    in_specs = ([pl.BlockSpec((1, blk), lambda i: (0, i))]
                + [full_spec(a) for a in params])
    out_spec = pl.BlockSpec((1, blk), lambda i: (0, i))

    out = pl.pallas_call(
        _make_kernel(L, Lp, cfg["act"], cfg["dot"]),
        out_shape=jax.ShapeDtypeStruct((1, total_pad), jnp.float32),
        grid_spec=pltpu.PrefetchScalarGridSpec(
            num_scalar_prefetch=0, grid=grid,
            in_specs=in_specs, out_specs=out_spec),
        compiler_params=pltpu.CompilerParams(
            dimension_semantics=("parallel",),
            vmem_limit_bytes=cfg["vmem_limit_bytes"]),
    )(x_flat, *params)

    out = out[0, :total].reshape(N, Lp)[:, :L]
    return out.reshape(N, 1, L)


# ----------------------- parameters & kernel packing ------------------------

def make_params(key, latent=8):
    keys = iter(jax.random.split(key, 32))

    def conv_init(cout, cin, k):
        bound = 1.0 / np.sqrt(cin * k)
        w = jax.random.uniform(next(keys), (cout, cin, k), jnp.float32, -bound, bound)
        b = jax.random.uniform(next(keys), (cout,), jnp.float32, -bound, bound)
        return w, b

    def bn_fold(c):
        eps = 1e-5
        gamma = 1.0 + 0.1 * jax.random.normal(next(keys), (c,), jnp.float32)
        beta = 0.1 * jax.random.normal(next(keys), (c,), jnp.float32)
        mean = 0.1 * jax.random.normal(next(keys), (c,), jnp.float32)
        var = 1.0 + 0.1 * jax.random.uniform(next(keys), (c,), jnp.float32)
        scale = gamma * jax.lax.rsqrt(var + eps)
        shift = beta - mean * scale
        return scale, shift

    w1, b1 = conv_init(32, 1, 3);       g1, s1 = bn_fold(32)
    w2, b2 = conv_init(64, 32, 3);      g2, s2 = bn_fold(64)
    w3, b3 = conv_init(latent, 64, 3);  g3, s3 = bn_fold(latent)
    bound = 1.0 / np.sqrt(latent * 2)   # ConvTranspose1d weight: (Cin, Cout, K)
    wd = jax.random.uniform(next(keys), (latent, 64, 2), jnp.float32, -bound, bound)
    bd = jax.random.uniform(next(keys), (64,), jnp.float32, -bound, bound)
    g4, s4 = bn_fold(64)
    w4, b4 = conv_init(32, 64, 3);      g5, s5 = bn_fold(32)
    w5, b5 = conv_init(1, 32, 3)

    return dict(w1=w1, b1=b1, g1=g1, s1=s1, w2=w2, b2=b2, g2=g2, s2=s2,
                w3=w3, b3=b3, g3=g3, s3=s3, wd=wd, bd=bd, g4=g4, s4=s4,
                w4=w4, b4=b4, g5=g5, s5=s5, w5=w5, b5=b5)


def prepare_kernel_params(P, act_dtype=jnp.float32, dot_dtype=jnp.float32):
    """Fold conv biases + BN scale into the weights / shifts; stack the three
    conv taps along a leading axis (3, Cout, Cin) so the kernel issues three
    accumulating matmuls without any tap-stack concatenate."""
    def fuse_conv(w, b, g, s):
        # w: (Cout, Cin, 3) -> (3, Cout, Cin), BN scale folded per out-channel.
        wm = jnp.transpose(w, (2, 0, 1)) * g[None, :, None]
        return wm.astype(dot_dtype), (s + b * g)[:, None].astype(jnp.float32)

    w2, s2 = fuse_conv(P["w2"], P["b2"], P["g2"], P["s2"])
    w3, s3 = fuse_conv(P["w3"], P["b3"], P["g3"], P["s3"])
    w4, s5 = fuse_conv(P["w4"], P["b4"], P["g5"], P["s5"])

    # Layer 1 (Cin == 1): keep as (32, 3) for the broadcast (VPU) path, f32.
    w1 = (P["w1"][:, 0, :] * P["g1"][:, None]).astype(jnp.float32)
    s1 = (P["s1"] + P["b1"] * P["g1"])[:, None].astype(jnp.float32)

    # ConvTranspose: (latent, 64, 2) -> (2, 64, latent); tap 0 = even outputs.
    wd = jnp.stack([P["wd"][:, :, 0].T, P["wd"][:, :, 1].T], axis=0)
    wd = (wd * P["g4"][None, :, None]).astype(dot_dtype)
    s4 = (P["s4"] + P["bd"] * P["g4"])[:, None].astype(jnp.float32)

    # Final conv (32 -> 1): (3, 1, 32) with Cout padded to 8 for MXU alignment.
    w5 = jnp.transpose(P["w5"], (2, 0, 1))                        # (3, 1, 32)
    w5 = jnp.pad(w5, ((0, 0), (0, 7), (0, 0))).astype(dot_dtype)  # (3, 8, 32)
    b5 = P["b5"].reshape(1, 1).astype(jnp.float32)

    return dict(w1=w1, s1=s1, w2=w2, s2=s2, w3=w3, s3=s3,
                wd=wd, s4=s4, w4=w4, s5=s5, w5=w5, b5=b5)


# ---------------------------- pure-JAX reference -----------------------------

def reference_forward(x_ncl, P):
    hp = jax.lax.Precision.HIGHEST
    x = jnp.transpose(x_ncl, (0, 2, 1))                       # (N, L, 1)
    N, L, _ = x.shape

    def conv(v, w, b):                                        # w: (Cout, Cin, 3)
        wt = jnp.transpose(w, (2, 1, 0))                      # (3, Cin, Cout)
        Lc = v.shape[1]
        vp = jnp.pad(v, ((0, 0), (1, 1), (0, 0)))
        return (jnp.einsum("nli,io->nlo", vp[:, 0:Lc], wt[0], precision=hp)
                + jnp.einsum("nli,io->nlo", vp[:, 1:Lc + 1], wt[1], precision=hp)
                + jnp.einsum("nli,io->nlo", vp[:, 2:Lc + 2], wt[2], precision=hp)
                + b)

    def bn_relu(v, g, s):
        return jnp.maximum(v * g + s, 0.0)

    h = bn_relu(conv(x, P["w1"], P["b1"]), P["g1"], P["s1"])
    h = bn_relu(conv(h, P["w2"], P["b2"]), P["g2"], P["s2"])
    Lh = L // 2
    m = h[:, :2 * Lh].reshape(N, Lh, 2, h.shape[2]).max(axis=2)
    z = bn_relu(conv(m, P["w3"], P["b3"]), P["g3"], P["s3"])
    u0 = jnp.einsum("nli,io->nlo", z, P["wd"][:, :, 0], precision=hp)
    u1 = jnp.einsum("nli,io->nlo", z, P["wd"][:, :, 1], precision=hp)
    y = jnp.zeros((N, L, 64), jnp.float32)
    y = y.at[:, 0:2 * Lh:2].set(u0).at[:, 1:2 * Lh:2].set(u1) + P["bd"]
    y = bn_relu(y, P["g4"], P["s4"])
    y = bn_relu(conv(y, P["w4"], P["b4"]), P["g5"], P["s5"])
    out = conv(y, P["w5"], P["b5"])
    return jnp.transpose(out, (0, 2, 1))                      # (N, 1, L)


# ----------------------------------- main ------------------------------------

if __name__ == "__main__":
    window_size = 16
    batch = 2
    latent = 8

    cfg = device_config()
    key = jax.random.PRNGKey(0)
    kx, kp = jax.random.split(key)
    raw = make_params(kp, latent)
    kparams = prepare_kernel_params(raw, act_dtype=cfg["act"], dot_dtype=cfg["dot"])
    x = jax.random.normal(kx, (batch, 1, window_size), jnp.float32)   # NCL

    out = jax.block_until_ready(
        conv_autoencoder_1d(x, kparams, window_size=window_size, cfg=cfg))
    ref = jax.block_until_ready(reference_forward(x, raw))

    uses_bf16 = (cfg["act"] == jnp.bfloat16) or (cfg["dot"] == jnp.bfloat16)
    atol = rtol = 5e-2 if uses_bf16 else 1e-3

    if out.shape != (batch, 1, window_size):
        raise AssertionError(f"bad output shape {out.shape}")
    if not bool(jnp.all(jnp.isfinite(out))):
        raise AssertionError("non-finite values in kernel output")
    if not jnp.allclose(out, ref, atol=atol, rtol=rtol):
        raise AssertionError(
            f"mismatch vs reference: max abs diff {float(jnp.max(jnp.abs(out - ref)))}")
    print("KERNEL_OK")
</pallas_src>

<mosaic_0001>
module attributes {stable_mosaic.version = 11 : i64} {
  func.func @kernel(%arg0: i32, %arg1: memref<1x128xf32, #tpu.memory_space<vmem>>, %arg2: memref<32x3xf32, #tpu.memory_space<vmem>>, %arg3: memref<32x1xf32, #tpu.memory_space<vmem>>, %arg4: memref<3x64x32xf32, #tpu.memory_space<vmem>>, %arg5: memref<64x1xf32, #tpu.memory_space<vmem>>, %arg6: memref<3x8x64xf32, #tpu.memory_space<vmem>>, %arg7: memref<8x1xf32, #tpu.memory_space<vmem>>, %arg8: memref<2x64x8xf32, #tpu.memory_space<vmem>>, %arg9: memref<64x1xf32, #tpu.memory_space<vmem>>, %arg10: memref<3x32x64xf32, #tpu.memory_space<vmem>>, %arg11: memref<32x1xf32, #tpu.memory_space<vmem>>, %arg12: memref<3x8x32xf32, #tpu.memory_space<vmem>>, %arg13: memref<1x1xf32, #tpu.memory_space<vmem>>, %arg14: memref<1x128xf32, #tpu.memory_space<vmem>>) attributes {dimension_semantics = [#tpu.dimension_semantics<parallel>], iteration_bounds = array<i64: 1>, scalar_prefetch = 0 : i64, scratch_operands = 0 : i64, tpu.core_type = #tpu.core_type<tc>, window_params = [{transform_indices = @transform_0, window_bounds = array<i64: 1, 128>}, {pipeline_mode = #tpu.pipeline_mode<synchronous>, transform_indices = @transform_1, window_bounds = array<i64: 32, 3>}, {pipeline_mode = #tpu.pipeline_mode<synchronous>, transform_indices = @transform_2, window_bounds = array<i64: 32, 1>}, {pipeline_mode = #tpu.pipeline_mode<synchronous>, transform_indices = @transform_3, window_bounds = array<i64: 3, 64, 32>}, {pipeline_mode = #tpu.pipeline_mode<synchronous>, transform_indices = @transform_4, window_bounds = array<i64: 64, 1>}, {pipeline_mode = #tpu.pipeline_mode<synchronous>, transform_indices = @transform_5, window_bounds = array<i64: 3, 8, 64>}, {pipeline_mode = #tpu.pipeline_mode<synchronous>, transform_indices = @transform_6, window_bounds = array<i64: 8, 1>}, {pipeline_mode = #tpu.pipeline_mode<synchronous>, transform_indices = @transform_7, window_bounds = array<i64: 2, 64, 8>}, {pipeline_mode = #tpu.pipeline_mode<synchronous>, transform_indices = @transform_8, window_bounds = array<i64: 64, 1>}, {pipeline_mode = #tpu.pipeline_mode<synchronous>, transform_indices = @transform_9, window_bounds = array<i64: 3, 32, 64>}, {pipeline_mode = #tpu.pipeline_mode<synchronous>, transform_indices = @transform_10, window_bounds = array<i64: 32, 1>}, {pipeline_mode = #tpu.pipeline_mode<synchronous>, transform_indices = @transform_11, window_bounds = array<i64: 3, 8, 32>}, {pipeline_mode = #tpu.pipeline_mode<synchronous>, transform_indices = @transform_12, window_bounds = array<i64: 1, 1>}, {transform_indices = @transform_13, window_bounds = array<i64: 1, 128>}]} {
    %c0 = arith.constant 0 : index
    %c0_0 = arith.constant 0 : index
    %0 = vector.load %arg1[%c0, %c0_0] : memref<1x128xf32, #tpu.memory_space<vmem>>, vector<1x128xf32>
    %1 = tpu.iota {dimensions = array<i32: 1>} : vector<1x128xi32>
    %c16_i32 = arith.constant 16 : i32
    %c0_i32 = arith.constant 0 : i32
    %2 = arith.cmpi eq, %c16_i32, %c0_i32 : i32
    %c1_i32 = arith.constant 1 : i32
    %3 = arith.select %2, %c1_i32, %c16_i32 : i32
    %4 = vector.broadcast %3 : i32 to vector<1x128xi32>
    %5 = arith.remsi %1, %4 : vector<1x128xi32>
    %c0_i32_1 = arith.constant 0 : i32
    %6 = vector.broadcast %c0_i32_1 : i32 to vector<1x128xi32>
    %7 = arith.cmpi ne, %5, %6 : vector<1x128xi32>
    %c0_i32_2 = arith.constant 0 : i32
    %8 = vector.broadcast %c0_i32_2 : i32 to vector<1x128xi32>
    %9 = arith.cmpi slt, %5, %8 : vector<1x128xi32>
    %c0_i32_3 = arith.constant 0 : i32
    %10 = arith.cmpi slt, %3, %c0_i32_3 : i32
    %11 = vector.broadcast %10 : i1 to vector<1x128xi1>
    %12 = vector.broadcast %11 : vector<1x128xi1> to vector<1x128xi1>
    %13 = arith.xori %9, %12 : vector<1x128xi1>
    %14 = arith.andi %13, %7 : vector<1x128xi1>
    %15 = vector.broadcast %3 : i32 to vector<1x128xi32>
    %16 = arith.addi %5, %15 : vector<1x128xi32>
    %17 = arith.select %14, %16, %5 : vector<1x128xi1>, vector<1x128xi32>
    %c1_i32_4 = arith.constant 1 : i32
    %18 = vector.broadcast %c1_i32_4 : i32 to vector<1x128xi32>
    %19 = arith.cmpi sge, %17, %18 : vector<1x128xi32>
    %c15_i32 = arith.constant 15 : i32
    %20 = vector.broadcast %c15_i32 : i32 to vector<1x128xi32>
    %21 = arith.cmpi slt, %17, %20 : vector<1x128xi32>
    %22 = vector.shape_cast %19 : vector<1x128xi1> to vector<1x128xi1>
    %23 = vector.broadcast %22 : vector<1x128xi1> to vector<64x128xi1>
    %24 = vector.shape_cast %21 : vector<1x128xi1> to vector<1x128xi1>
    %25 = vector.broadcast %24 : vector<1x128xi1> to vector<64x128xi1>
    %c2_i32 = arith.constant 2 : i32
    %26 = vector.broadcast %c2_i32 : i32 to vector<1x128xi32>
    %27 = arith.cmpi sge, %17, %26 : vector<1x128xi32>
    %28 = vector.shape_cast %27 : vector<1x128xi1> to vector<1x128xi1>
    %29 = vector.broadcast %28 : vector<1x128xi1> to vector<64x128xi1>
    %c14_i32 = arith.constant 14 : i32
    %30 = vector.broadcast %c14_i32 : i32 to vector<1x128xi32>
    %31 = arith.cmpi slt, %17, %30 : vector<1x128xi32>
    %32 = vector.shape_cast %31 : vector<1x128xi1> to vector<1x128xi1>
    %33 = vector.broadcast %32 : vector<1x128xi1> to vector<64x128xi1>
    %c2_i32_5 = arith.constant 2 : i32
    %c0_i32_6 = arith.constant 0 : i32
    %34 = arith.cmpi eq, %c2_i32_5, %c0_i32_6 : i32
    %c1_i32_7 = arith.constant 1 : i32
    %35 = arith.select %34, %c1_i32_7, %c2_i32_5 : i32
    %36 = vector.broadcast %35 : i32 to vector<1x128xi32>
    %37 = arith.remsi %17, %36 : vector<1x128xi32>
    %c0_i32_8 = arith.constant 0 : i32
    %38 = vector.broadcast %c0_i32_8 : i32 to vector<1x128xi32>
    %39 = arith.cmpi ne, %37, %38 : vector<1x128xi32>
    %c0_i32_9 = arith.constant 0 : i32
    %40 = vector.broadcast %c0_i32_9 : i32 to vector<1x128xi32>
    %41 = arith.cmpi slt, %37, %40 : vector<1x128xi32>
    %c0_i32_10 = arith.constant 0 : i32
    %42 = arith.cmpi slt, %35, %c0_i32_10 : i32
    %43 = vector.broadcast %42 : i1 to vector<1x128xi1>
    %44 = vector.broadcast %43 : vector<1x128xi1> to vector<1x128xi1>
    %45 = arith.xori %41, %44 : vector<1x128xi1>
    %46 = arith.andi %45, %39 : vector<1x128xi1>
    %47 = vector.broadcast %35 : i32 to vector<1x128xi32>
    %48 = arith.addi %37, %47 : vector<1x128xi32>
    %49 = arith.select %46, %48, %37 : vector<1x128xi1>, vector<1x128xi32>
    %c0_i32_11 = arith.constant 0 : i32
    %50 = vector.broadcast %c0_i32_11 : i32 to vector<1x128xi32>
    %51 = arith.cmpi eq, %49, %50 : vector<1x128xi32>
    %52 = vector.shape_cast %51 : vector<1x128xi1> to vector<1x128xi1>
    %53 = vector.broadcast %52 : vector<1x128xi1> to vector<64x128xi1>
    %c0_12 = arith.constant 0 : index
    %c0_13 = arith.constant 0 : index
    %54 = vector.load %arg2[%c0_12, %c0_13] : memref<32x3xf32, #tpu.memory_space<vmem>>, vector<32x1xf32>
    %c1_i32_14 = arith.constant 1 : i32
    %55 = tpu.dynamic_rotate %0 by %c1_i32_14 dim 1 : vector<1x128xf32>, i32 -> vector<1x128xf32>
    %cst = arith.constant 0.000000e+00 : f32
    %56 = vector.broadcast %cst : f32 to vector<1x128xf32>
    %57 = arith.select %19, %55, %56 : vector<1x128xi1>, vector<1x128xf32>
    %58 = vector.broadcast %54 : vector<32x1xf32> to vector<32x128xf32>
    %59 = vector.broadcast %57 : vector<1x128xf32> to vector<32x128xf32>
    %60 = arith.mulf %58, %59 : vector<32x128xf32>
    %c0_15 = arith.constant 0 : index
    %c1 = arith.constant 1 : index
    %61 = vector.load %arg2[%c0_15, %c1] : memref<32x3xf32, #tpu.memory_space<vmem>>, vector<32x1xf32>
    %62 = vector.broadcast %61 : vector<32x1xf32> to vector<32x128xf32>
    %63 = vector.broadcast %0 : vector<1x128xf32> to vector<32x128xf32>
    %64 = arith.mulf %62, %63 : vector<32x128xf32>
    %65 = arith.addf %60, %64 : vector<32x128xf32>
    %c0_16 = arith.constant 0 : index
    %c2 = arith.constant 2 : index
    %66 = vector.load %arg2[%c0_16, %c2] : memref<32x3xf32, #tpu.memory_space<vmem>>, vector<32x1xf32>
    %c127_i32 = arith.constant 127 : i32
    %67 = tpu.dynamic_rotate %0 by %c127_i32 dim 1 : vector<1x128xf32>, i32 -> vector<1x128xf32>
    %cst_17 = arith.constant 0.000000e+00 : f32
    %68 = vector.broadcast %cst_17 : f32 to vector<1x128xf32>
    %69 = arith.select %21, %67, %68 : vector<1x128xi1>, vector<1x128xf32>
    %70 = vector.broadcast %66 : vector<32x1xf32> to vector<32x128xf32>
    %71 = vector.broadcast %69 : vector<1x128xf32> to vector<32x128xf32>
    %72 = arith.mulf %70, %71 : vector<32x128xf32>
    %73 = arith.addf %65, %72 : vector<32x128xf32>
    %c0_18 = arith.constant 0 : index
    %c0_19 = arith.constant 0 : index
    %74 = vector.load %arg3[%c0_18, %c0_19] : memref<32x1xf32, #tpu.memory_space<vmem>>, vector<32x1xf32>
    %75 = vector.broadcast %74 : vector<32x1xf32> to vector<32x128xf32>
    %76 = arith.addf %73, %75 : vector<32x128xf32>
    %cst_20 = arith.constant 0.000000e+00 : f32
    %77 = vector.broadcast %cst_20 : f32 to vector<32x128xf32>
    %78 = arith.maximumf %76, %77 : vector<32x128xf32>
    %79 = vector.extract_strided_slice %23 {offsets = [0, 0], sizes = [32, 128], strides = [1, 1]} : vector<64x128xi1> to vector<32x128xi1>
    %80 = vector.extract_strided_slice %25 {offsets = [0, 0], sizes = [32, 128], strides = [1, 1]} : vector<64x128xi1> to vector<32x128xi1>
    %c0_21 = arith.constant 0 : index
    %c0_22 = arith.constant 0 : index
    %c0_23 = arith.constant 0 : index
    %81 = vector.load %arg4[%c0_21, %c0_22, %c0_23] : memref<3x64x32xf32, #tpu.memory_space<vmem>>, vector<1x64x32xf32>
    %82 = vector.shape_cast %81 : vector<1x64x32xf32> to vector<64x32xf32>
    %c1_i32_24 = arith.constant 1 : i32
    %83 = tpu.dynamic_rotate %78 by %c1_i32_24 dim 1 : vector<32x128xf32>, i32 -> vector<32x128xf32>
    %cst_25 = arith.constant 0.000000e+00 : f32
    %84 = vector.broadcast %cst_25 : f32 to vector<32x128xf32>
    %85 = arith.select %79, %83, %84 : vector<32x128xi1>, vector<32x128xf32>
    %cst_26 = arith.constant dense<0.000000e+00> : vector<64x128xf32>
    %86 = tpu.matmul %82, %85, %cst_26 {dimension_numbers = #tpu.dot_dimension_numbers<[1], [0], [0], [1], [0, 0, 1, 1], [], []>} : vector<64x32xf32>, vector<32x128xf32>, vector<64x128xf32> -> vector<64x128xf32>
    %c1_27 = arith.constant 1 : index
    %c0_28 = arith.constant 0 : index
    %c0_29 = arith.constant 0 : index
    %87 = vector.load %arg4[%c1_27, %c0_28, %c0_29] : memref<3x64x32xf32, #tpu.memory_space<vmem>>, vector<1x64x32xf32>
    %88 = vector.shape_cast %87 : vector<1x64x32xf32> to vector<64x32xf32>
    %cst_30 = arith.constant dense<0.000000e+00> : vector<64x128xf32>
    %89 = tpu.matmul %88, %78, %cst_30 {dimension_numbers = #tpu.dot_dimension_numbers<[1], [0], [0], [1], [0, 0, 1, 1], [], []>} : vector<64x32xf32>, vector<32x128xf32>, vector<64x128xf32> -> vector<64x128xf32>
    %90 = arith.addf %86, %89 : vector<64x128xf32>
    %c2_31 = arith.constant 2 : index
    %c0_32 = arith.constant 0 : index
    %c0_33 = arith.constant 0 : index
    %91 = vector.load %arg4[%c2_31, %c0_32, %c0_33] : memref<3x64x32xf32, #tpu.memory_space<vmem>>, vector<1x64x32xf32>
    %92 = vector.shape_cast %91 : vector<1x64x32xf32> to vector<64x32xf32>
    %c127_i32_34 = arith.constant 127 : i32
    %93 = tpu.dynamic_rotate %78 by %c127_i32_34 dim 1 : vector<32x128xf32>, i32 -> vector<32x128xf32>
    %cst_35 = arith.constant 0.000000e+00 : f32
    %94 = vector.broadcast %cst_35 : f32 to vector<32x128xf32>
    %95 = arith.select %80, %93, %94 : vector<32x128xi1>, vector<32x128xf32>
    %cst_36 = arith.constant dense<0.000000e+00> : vector<64x128xf32>
    %96 = tpu.matmul %92, %95, %cst_36 {dimension_numbers = #tpu.dot_dimension_numbers<[1], [0], [0], [1], [0, 0, 1, 1], [], []>} : vector<64x32xf32>, vector<32x128xf32>, vector<64x128xf32> -> vector<64x128xf32>
    %97 = arith.addf %90, %96 : vector<64x128xf32>
    %c0_37 = arith.constant 0 : index
    %c0_38 = arith.constant 0 : index
    %98 = vector.load %arg5[%c0_37, %c0_38] : memref<64x1xf32, #tpu.memory_space<vmem>>, vector<64x1xf32>
    %99 = vector.broadcast %98 : vector<64x1xf32> to vector<64x128xf32>
    %100 = arith.addf %97, %99 : vector<64x128xf32>
    %cst_39 = arith.constant 0.000000e+00 : f32
    %101 = vector.broadcast %cst_39 : f32 to vector<64x128xf32>
    %102 = arith.maximumf %100, %101 : vector<64x128xf32>
    %c127_i32_40 = arith.constant 127 : i32
    %103 = tpu.dynamic_rotate %102 by %c127_i32_40 dim 1 : vector<64x128xf32>, i32 -> vector<64x128xf32>
    %cst_41 = arith.constant 0.000000e+00 : f32
    %104 = vector.broadcast %cst_41 : f32 to vector<64x128xf32>
    %105 = arith.select %25, %103, %104 : vector<64x128xi1>, vector<64x128xf32>
    %106 = arith.maximumf %102, %105 : vector<64x128xf32>
    %c0_42 = arith.constant 0 : index
    %c0_43 = arith.constant 0 : index
    %c0_44 = arith.constant 0 : index
    %107 = vector.load %arg6[%c0_42, %c0_43, %c0_44] : memref<3x8x64xf32, #tpu.memory_space<vmem>>, vector<1x8x64xf32>
    %108 = vector.shape_cast %107 : vector<1x8x64xf32> to vector<8x64xf32>
    %c2_i32_45 = arith.constant 2 : i32
    %109 = tpu.dynamic_rotate %106 by %c2_i32_45 dim 1 : vector<64x128xf32>, i32 -> vector<64x128xf32>
    %cst_46 = arith.constant 0.000000e+00 : f32
    %110 = vector.broadcast %cst_46 : f32 to vector<64x128xf32>
    %111 = arith.select %29, %109, %110 : vector<64x128xi1>, vector<64x128xf32>
    %cst_47 = arith.constant dense<0.000000e+00> : vector<8x128xf32>
    %112 = tpu.matmul %108, %111, %cst_47 {dimension_numbers = #tpu.dot_dimension_numbers<[1], [0], [0], [1], [0, 0, 1, 1], [], []>} : vector<8x64xf32>, vector<64x128xf32>, vector<8x128xf32> -> vector<8x128xf32>
    %c1_48 = arith.constant 1 : index
    %c0_49 = arith.constant 0 : index
    %c0_50 = arith.constant 0 : index
    %113 = vector.load %arg6[%c1_48, %c0_49, %c0_50] : memref<3x8x64xf32, #tpu.memory_space<vmem>>, vector<1x8x64xf32>
    %114 = vector.shape_cast %113 : vector<1x8x64xf32> to vector<8x64xf32>
    %cst_51 = arith.constant dense<0.000000e+00> : vector<8x128xf32>
    %115 = tpu.matmul %114, %106, %cst_51 {dimension_numbers = #tpu.dot_dimension_numbers<[1], [0], [0], [1], [0, 0, 1, 1], [], []>} : vector<8x64xf32>, vector<64x128xf32>, vector<8x128xf32> -> vector<8x128xf32>
    %116 = arith.addf %112, %115 : vector<8x128xf32>
    %c2_52 = arith.constant 2 : index
    %c0_53 = arith.constant 0 : index
    %c0_54 = arith.constant 0 : index
    %117 = vector.load %arg6[%c2_52, %c0_53, %c0_54] : memref<3x8x64xf32, #tpu.memory_space<vmem>>, vector<1x8x64xf32>
    %118 = vector.shape_cast %117 : vector<1x8x64xf32> to vector<8x64xf32>
    %c126_i32 = arith.constant 126 : i32
    %119 = tpu.dynamic_rotate %106 by %c126_i32 dim 1 : vector<64x128xf32>, i32 -> vector<64x128xf32>
    %cst_55 = arith.constant 0.000000e+00 : f32
    %120 = vector.broadcast %cst_55 : f32 to vector<64x128xf32>
    %121 = arith.select %33, %119, %120 : vector<64x128xi1>, vector<64x128xf32>
    %cst_56 = arith.constant dense<0.000000e+00> : vector<8x128xf32>
    %122 = tpu.matmul %118, %121, %cst_56 {dimension_numbers = #tpu.dot_dimension_numbers<[1], [0], [0], [1], [0, 0, 1, 1], [], []>} : vector<8x64xf32>, vector<64x128xf32>, vector<8x128xf32> -> vector<8x128xf32>
    %123 = arith.addf %116, %122 : vector<8x128xf32>
    %c0_57 = arith.constant 0 : index
    %c0_58 = arith.constant 0 : index
    %124 = vector.load %arg7[%c0_57, %c0_58] : memref<8x1xf32, #tpu.memory_space<vmem>>, vector<8x1xf32>
    %125 = vector.broadcast %124 : vector<8x1xf32> to vector<8x128xf32>
    %126 = arith.addf %123, %125 : vector<8x128xf32>
    %cst_59 = arith.constant 0.000000e+00 : f32
    %127 = vector.broadcast %cst_59 : f32 to vector<8x128xf32>
    %128 = arith.maximumf %126, %127 : vector<8x128xf32>
    %c0_60 = arith.constant 0 : index
    %c0_61 = arith.constant 0 : index
    %c0_62 = arith.constant 0 : index
    %129 = vector.load %arg8[%c0_60, %c0_61, %c0_62] : memref<2x64x8xf32, #tpu.memory_space<vmem>>, vector<1x64x8xf32>
    %130 = vector.shape_cast %129 : vector<1x64x8xf32> to vector<64x8xf32>
    %cst_63 = arith.constant dense<0.000000e+00> : vector<64x128xf32>
    %131 = tpu.matmul %130, %128, %cst_63 {dimension_numbers = #tpu.dot_dimension_numbers<[1], [0], [0], [1], [0, 0, 1, 1], [], []>} : vector<64x8xf32>, vector<8x128xf32>, vector<64x128xf32> -> vector<64x128xf32>
    %c1_64 = arith.constant 1 : index
    %c0_65 = arith.constant 0 : index
    %c0_66 = arith.constant 0 : index
    %132 = vector.load %arg8[%c1_64, %c0_65, %c0_66] : memref<2x64x8xf32, #tpu.memory_space<vmem>>, vector<1x64x8xf32>
    %133 = vector.shape_cast %132 : vector<1x64x8xf32> to vector<64x8xf32>
    %cst_67 = arith.constant dense<0.000000e+00> : vector<64x128xf32>
    %134 = tpu.matmul %133, %128, %cst_67 {dimension_numbers = #tpu.dot_dimension_numbers<[1], [0], [0], [1], [0, 0, 1, 1], [], []>} : vector<64x8xf32>, vector<8x128xf32>, vector<64x128xf32> -> vector<64x128xf32>
    %c1_i32_68 = arith.constant 1 : i32
    %135 = tpu.dynamic_rotate %134 by %c1_i32_68 dim 1 : vector<64x128xf32>, i32 -> vector<64x128xf32>
    %cst_69 = arith.constant 0.000000e+00 : f32
    %136 = vector.broadcast %cst_69 : f32 to vector<64x128xf32>
    %137 = arith.select %23, %135, %136 : vector<64x128xi1>, vector<64x128xf32>
    %138 = arith.select %53, %131, %137 : vector<64x128xi1>, vector<64x128xf32>
    %c0_70 = arith.constant 0 : index
    %c0_71 = arith.constant 0 : index
    %139 = vector.load %arg9[%c0_70, %c0_71] : memref<64x1xf32, #tpu.memory_space<vmem>>, vector<64x1xf32>
    %140 = vector.broadcast %139 : vector<64x1xf32> to vector<64x128xf32>
    %141 = arith.addf %138, %140 : vector<64x128xf32>
    %cst_72 = arith.constant 0.000000e+00 : f32
    %142 = vector.broadcast %cst_72 : f32 to vector<64x128xf32>
    %143 = arith.maximumf %141, %142 : vector<64x128xf32>
    %c0_73 = arith.constant 0 : index
    %c0_74 = arith.constant 0 : index
    %c0_75 = arith.constant 0 : index
    %144 = vector.load %arg10[%c0_73, %c0_74, %c0_75] : memref<3x32x64xf32, #tpu.memory_space<vmem>>, vector<1x32x64xf32>
    %145 = vector.shape_cast %144 : vector<1x32x64xf32> to vector<32x64xf32>
    %c1_i32_76 = arith.constant 1 : i32
    %146 = tpu.dynamic_rotate %143 by %c1_i32_76 dim 1 : vector<64x128xf32>, i32 -> vector<64x128xf32>
    %cst_77 = arith.constant 0.000000e+00 : f32
    %147 = vector.broadcast %cst_77 : f32 to vector<64x128xf32>
    %148 = arith.select %23, %146, %147 : vector<64x128xi1>, vector<64x128xf32>
    %cst_78 = arith.constant dense<0.000000e+00> : vector<32x128xf32>
    %149 = tpu.matmul %145, %148, %cst_78 {dimension_numbers = #tpu.dot_dimension_numbers<[1], [0], [0], [1], [0, 0, 1, 1], [], []>} : vector<32x64xf32>, vector<64x128xf32>, vector<32x128xf32> -> vector<32x128xf32>
    %c1_79 = arith.constant 1 : index
    %c0_80 = arith.constant 0 : index
    %c0_81 = arith.constant 0 : index
    %150 = vector.load %arg10[%c1_79, %c0_80, %c0_81] : memref<3x32x64xf32, #tpu.memory_space<vmem>>, vector<1x32x64xf32>
    %151 = vector.shape_cast %150 : vector<1x32x64xf32> to vector<32x64xf32>
    %cst_82 = arith.constant dense<0.000000e+00> : vector<32x128xf32>
    %152 = tpu.matmul %151, %143, %cst_82 {dimension_numbers = #tpu.dot_dimension_numbers<[1], [0], [0], [1], [0, 0, 1, 1], [], []>} : vector<32x64xf32>, vector<64x128xf32>, vector<32x128xf32> -> vector<32x128xf32>
    %153 = arith.addf %149, %152 : vector<32x128xf32>
    %c2_83 = arith.constant 2 : index
    %c0_84 = arith.constant 0 : index
    %c0_85 = arith.constant 0 : index
    %154 = vector.load %arg10[%c2_83, %c0_84, %c0_85] : memref<3x32x64xf32, #tpu.memory_space<vmem>>, vector<1x32x64xf32>
    %155 = vector.shape_cast %154 : vector<1x32x64xf32> to vector<32x64xf32>
    %c127_i32_86 = arith.constant 127 : i32
    %156 = tpu.dynamic_rotate %143 by %c127_i32_86 dim 1 : vector<64x128xf32>, i32 -> vector<64x128xf32>
    %cst_87 = arith.constant 0.000000e+00 : f32
    %157 = vector.broadcast %cst_87 : f32 to vector<64x128xf32>
    %158 = arith.select %25, %156, %157 : vector<64x128xi1>, vector<64x128xf32>
    %cst_88 = arith.constant dense<0.000000e+00> : vector<32x128xf32>
    %159 = tpu.matmul %155, %158, %cst_88 {dimension_numbers = #tpu.dot_dimension_numbers<[1], [0], [0], [1], [0, 0, 1, 1], [], []>} : vector<32x64xf32>, vector<64x128xf32>, vector<32x128xf32> -> vector<32x128xf32>
    %160 = arith.addf %153, %159 : vector<32x128xf32>
    %c0_89 = arith.constant 0 : index
    %c0_90 = arith.constant 0 : index
    %161 = vector.load %arg11[%c0_89, %c0_90] : memref<32x1xf32, #tpu.memory_space<vmem>>, vector<32x1xf32>
    %162 = vector.broadcast %161 : vector<32x1xf32> to vector<32x128xf32>
    %163 = arith.addf %160, %162 : vector<32x128xf32>
    %cst_91 = arith.constant 0.000000e+00 : f32
    %164 = vector.broadcast %cst_91 : f32 to vector<32x128xf32>
    %165 = arith.maximumf %163, %164 : vector<32x128xf32>
    %c0_92 = arith.constant 0 : index
    %c0_93 = arith.constant 0 : index
    %c0_94 = arith.constant 0 : index
    %166 = vector.load %arg12[%c0_92, %c0_93, %c0_94] : memref<3x8x32xf32, #tpu.memory_space<vmem>>, vector<1x8x32xf32>
    %167 = vector.shape_cast %166 : vector<1x8x32xf32> to vector<8x32xf32>
    %168 = vector.extract_strided_slice %23 {offsets = [0, 0], sizes = [32, 128], strides = [1, 1]} : vector<64x128xi1> to vector<32x128xi1>
    %c1_i32_95 = arith.constant 1 : i32
    %169 = tpu.dynamic_rotate %165 by %c1_i32_95 dim 1 : vector<32x128xf32>, i32 -> vector<32x128xf32>
    %cst_96 = arith.constant 0.000000e+00 : f32
    %170 = vector.broadcast %cst_96 : f32 to vector<32x128xf32>
    %171 = arith.select %168, %169, %170 : vector<32x128xi1>, vector<32x128xf32>
    %cst_97 = arith.constant dense<0.000000e+00> : vector<8x128xf32>
    %172 = tpu.matmul %167, %171, %cst_97 {dimension_numbers = #tpu.dot_dimension_numbers<[1], [0], [0], [1], [0, 0, 1, 1], [], []>} : vector<8x32xf32>, vector<32x128xf32>, vector<8x128xf32> -> vector<8x128xf32>
    %c1_98 = arith.constant 1 : index
    %c0_99 = arith.constant 0 : index
    %c0_100 = arith.constant 0 : index
    %173 = vector.load %arg12[%c1_98, %c0_99, %c0_100] : memref<3x8x32xf32, #tpu.memory_space<vmem>>, vector<1x8x32xf32>
    %174 = vector.shape_cast %173 : vector<1x8x32xf32> to vector<8x32xf32>
    %cst_101 = arith.constant dense<0.000000e+00> : vector<8x128xf32>
    %175 = tpu.matmul %174, %165, %cst_101 {dimension_numbers = #tpu.dot_dimension_numbers<[1], [0], [0], [1], [0, 0, 1, 1], [], []>} : vector<8x32xf32>, vector<32x128xf32>, vector<8x128xf32> -> vector<8x128xf32>
    %176 = arith.addf %172, %175 : vector<8x128xf32>
    %c2_102 = arith.constant 2 : index
    %c0_103 = arith.constant 0 : index
    %c0_104 = arith.constant 0 : index
    %177 = vector.load %arg12[%c2_102, %c0_103, %c0_104] : memref<3x8x32xf32, #tpu.memory_space<vmem>>, vector<1x8x32xf32>
    %178 = vector.shape_cast %177 : vector<1x8x32xf32> to vector<8x32xf32>
    %179 = vector.extract_strided_slice %25 {offsets = [0, 0], sizes = [32, 128], strides = [1, 1]} : vector<64x128xi1> to vector<32x128xi1>
    %c127_i32_105 = arith.constant 127 : i32
    %180 = tpu.dynamic_rotate %165 by %c127_i32_105 dim 1 : vector<32x128xf32>, i32 -> vector<32x128xf32>
    %cst_106 = arith.constant 0.000000e+00 : f32
    %181 = vector.broadcast %cst_106 : f32 to vector<32x128xf32>
    %182 = arith.select %179, %180, %181 : vector<32x128xi1>, vector<32x128xf32>
    %cst_107 = arith.constant dense<0.000000e+00> : vector<8x128xf32>
    %183 = tpu.matmul %178, %182, %cst_107 {dimension_numbers = #tpu.dot_dimension_numbers<[1], [0], [0], [1], [0, 0, 1, 1], [], []>} : vector<8x32xf32>, vector<32x128xf32>, vector<8x128xf32> -> vector<8x128xf32>
    %184 = arith.addf %176, %183 : vector<8x128xf32>
    %185 = vector.extract_strided_slice %184 {offsets = [0, 0], sizes = [1, 128], strides = [1, 1]} : vector<8x128xf32> to vector<1x128xf32>
    %c0_108 = arith.constant 0 : index
    %c0_109 = arith.constant 0 : index
    %186 = vector.load %arg13[%c0_108, %c0_109] : memref<1x1xf32, #tpu.memory_space<vmem>>, vector<1x1xf32>
    %187 = vector.broadcast %186 : vector<1x1xf32> to vector<1x128xf32>
    %188 = arith.addf %185, %187 : vector<1x128xf32>
    %c0_110 = arith.constant 0 : index
    %c0_111 = arith.constant 0 : index
    %189 = vector.load %arg14[%c0_110, %c0_111] : memref<1x128xf32, #tpu.memory_space<vmem>>, vector<1x128xf32>
    tpu.vector_store %arg14[%c0_110, %c0_111], %188 {strides = array<i32>} : memref<1x128xf32, #tpu.memory_space<vmem>>, vector<1x128xf32>,
    return
  }
  func.func @transform_0(%arg0: i32) -> (i32, i32) {
    %c0_i32 = arith.constant 0 : i32
    %c0_i32_0 = arith.constant 0 : i32
    return %c0_i32, %arg0 : i32, i32
  }
  func.func @transform_1(%arg0: i32) -> (i32, i32) {
    %c0_i32 = arith.constant 0 : i32
    %c0_i32_0 = arith.constant 0 : i32
    %c0_i32_1 = arith.constant 0 : i32
    return %c0_i32, %c0_i32_0 : i32, i32
  }
  func.func @transform_2(%arg0: i32) -> (i32, i32) {
    %c0_i32 = arith.constant 0 : i32
    %c0_i32_0 = arith.constant 0 : i32
    %c0_i32_1 = arith.constant 0 : i32
    return %c0_i32, %c0_i32_0 : i32, i32
  }
  func.func @transform_3(%arg0: i32) -> (i32, i32, i32) {
    %c0_i32 = arith.constant 0 : i32
    %c0_i32_0 = arith.constant 0 : i32
    %c0_i32_1 = arith.constant 0 : i32
    %c0_i32_2 = arith.constant 0 : i32
    return %c0_i32, %c0_i32_0, %c0_i32_1 : i32, i32, i32
  }
  func.func @transform_4(%arg0: i32) -> (i32, i32) {
    %c0_i32 = arith.constant 0 : i32
    %c0_i32_0 = arith.constant 0 : i32
    %c0_i32_1 = arith.constant 0 : i32
    return %c0_i32, %c0_i32_0 : i32, i32
  }
  func.func @transform_5(%arg0: i32) -> (i32, i32, i32) {
    %c0_i32 = arith.constant 0 : i32
    %c0_i32_0 = arith.constant 0 : i32
    %c0_i32_1 = arith.constant 0 : i32
    %c0_i32_2 = arith.constant 0 : i32
    return %c0_i32, %c0_i32_0, %c0_i32_1 : i32, i32, i32
  }
  func.func @transform_6(%arg0: i32) -> (i32, i32) {
    %c0_i32 = arith.constant 0 : i32
    %c0_i32_0 = arith.constant 0 : i32
    %c0_i32_1 = arith.constant 0 : i32
    return %c0_i32, %c0_i32_0 : i32, i32
  }
  func.func @transform_7(%arg0: i32) -> (i32, i32, i32) {
    %c0_i32 = arith.constant 0 : i32
    %c0_i32_0 = arith.constant 0 : i32
    %c0_i32_1 = arith.constant 0 : i32
    %c0_i32_2 = arith.constant 0 : i32
    return %c0_i32, %c0_i32_0, %c0_i32_1 : i32, i32, i32
  }
  func.func @transform_8(%arg0: i32) -> (i32, i32) {
    %c0_i32 = arith.constant 0 : i32
    %c0_i32_0 = arith.constant 0 : i32
    %c0_i32_1 = arith.constant 0 : i32
    return %c0_i32, %c0_i32_0 : i32, i32
  }
  func.func @transform_9(%arg0: i32) -> (i32, i32, i32) {
    %c0_i32 = arith.constant 0 : i32
    %c0_i32_0 = arith.constant 0 : i32
    %c0_i32_1 = arith.constant 0 : i32
    %c0_i32_2 = arith.constant 0 : i32
    return %c0_i32, %c0_i32_0, %c0_i32_1 : i32, i32, i32
  }
  func.func @transform_10(%arg0: i32) -> (i32, i32) {
    %c0_i32 = arith.constant 0 : i32
    %c0_i32_0 = arith.constant 0 : i32
    %c0_i32_1 = arith.constant 0 : i32
    return %c0_i32, %c0_i32_0 : i32, i32
  }
  func.func @transform_11(%arg0: i32) -> (i32, i32, i32) {
    %c0_i32 = arith.constant 0 : i32
    %c0_i32_0 = arith.constant 0 : i32
    %c0_i32_1 = arith.constant 0 : i32
    %c0_i32_2 = arith.constant 0 : i32
    return %c0_i32, %c0_i32_0, %c0_i32_1 : i32, i32, i32
  }
  func.func @transform_12(%arg0: i32) -> (i32, i32) {
    %c0_i32 = arith.constant 0 : i32
    %c0_i32_0 = arith.constant 0 : i32
    %c0_i32_1 = arith.constant 0 : i32
    return %c0_i32, %c0_i32_0 : i32, i32
  }
  func.func @transform_13(%arg0: i32) -> (i32, i32) {
    %c0_i32 = arith.constant 0 : i32
    %c0_i32_0 = arith.constant 0 : i32
    return %c0_i32, %arg0 : i32, i32
  }
}

</mosaic_0001>

<llo_original>
// kernel: tpu_custom_call.1
$region0: #{tpu_custom_call.1}
  #allocation0 [shape = 'u32[]', space=smem, size = 0x4, offset = 0x4, fixed_abs, tag = 'smem constant byte address 0x4 - core index']
  #allocation1 [shape = 'u32[144,128]{1,0:T(1,128)}', space=vmem, size = 0x12000, scoped, tag = 'internal scratch']
  #allocation2 [shape = 'f32[1,1]{1,0:T(1,128)S(1)}', space=vmem, size = 0x200, scoped, tag = 'scoped memory for tpu_custom_call.1']
  %s0 = inlined_call_operand.vmem [shape: f32[1,128], index: 0, kind: input, shape index: {}]
  %s1 = inlined_call_operand.vmem [shape: f32[32,3], index: 1, kind: input, shape index: {}]
  %s2 = inlined_call_operand.vmem [shape: f32[32,1], index: 2, kind: input, shape index: {}]
  %s3 = inlined_call_operand.vmem [shape: f32[3,64,32], index: 3, kind: input, shape index: {}]
  %s4 = inlined_call_operand.vmem [shape: f32[64,1], index: 4, kind: input, shape index: {}]
  %s5 = inlined_call_operand.vmem [shape: f32[3,8,64], index: 5, kind: input, shape index: {}]
  %s6 = inlined_call_operand.vmem [shape: f32[8,1], index: 6, kind: input, shape index: {}]
  %s7 = inlined_call_operand.vmem [shape: f32[2,64,8], index: 7, kind: input, shape index: {}]
  %s8 = inlined_call_operand.vmem [shape: f32[64,1], index: 8, kind: input, shape index: {}]
  %s9 = inlined_call_operand.vmem [shape: f32[3,32,64], index: 9, kind: input, shape index: {}]
  %s10 = inlined_call_operand.vmem [shape: f32[32,1], index: 10, kind: input, shape index: {}]
  %s11 = inlined_call_operand.vmem [shape: f32[3,8,32], index: 11, kind: input, shape index: {}]
  %s12 = inlined_call_operand.<no memory space> [shape: f32[1,1], index: 12, kind: input, shape index: {}]
  %s13 = inlined_call_operand.hbm [shape: f32[1,128], index: 13, kind: output, shape index: {}]
  %s14 = sld [smem:[#allocation0]]
  $region62: #{tpu_custom_call.1} parent=0
    _
  %s16 = ssub.s32 1, %s14
  %s17 = scalar_select 0, %s16, %s14
  %v18 = vstv %s12
  %19 = vst [vmem:[#allocation2] sm:$0x1] %v18
  $region1: #{tpu_custom_call.1} parent=0
    #allocation3 [shape = 'u8[512]{0}', space=vmem, size = 0x400, scoped, tag = 'output window, operand 0, single buffered']
    #allocation4 [shape = 's32[1]{0}', space=sflag, size = 0x4, scoped, tag = 'scoped memory for tpu_custom_call.1']
    %20 = vsyncpa [#allocation4], 0
    // Predicated region
    $region2: #{tpu_custom_call.1} parent=1 // pred_check
      _
    $region3: #{tpu_custom_call.1} parent=1 // pred_check_branch
      %22 = sbr.rel (0) target = $region5
    $region4: #{tpu_custom_call.1} parent=1 // pred_region
      _
    $region5: #{tpu_custom_call.1} parent=1 // pred_fallthru
      _
    // Predicated region
    $region6: #{tpu_custom_call.1} parent=1 // pred_check
      _
    $region7: #{tpu_custom_call.1} parent=1 // pred_check_branch
      %24 = sbr.rel (0) target = $region9
    $region8: #{tpu_custom_call.1} parent=1 // pred_region
      _
    $region9: #{tpu_custom_call.1} parent=1 // pred_fallthru
      _
    // Predicated region
    $region10: #{tpu_custom_call.1} parent=1 // pred_check
      _
    $region11: #{tpu_custom_call.1} parent=1 // pred_check_branch
      %26 = sbr.rel (0) target = $region13
    $region12: #{tpu_custom_call.1} parent=1 // pred_region
      _
    $region13: #{tpu_custom_call.1} parent=1 // pred_fallthru
      _
    // Predicated region
    $region14: #{tpu_custom_call.1} parent=1 // pred_check
      _
    $region15: #{tpu_custom_call.1} parent=1 // pred_check_branch
      %28 = sbr.rel (0) target = $region17
    $region16: #{tpu_custom_call.1} parent=1 // pred_region
      _
    $region17: #{tpu_custom_call.1} parent=1 // pred_fallthru
      _
    // Predicated region
    $region18: #{tpu_custom_call.1} parent=1 // pred_check
      _
    $region19: #{tpu_custom_call.1} parent=1 // pred_check_branch
      %30 = sbr.rel (0) target = $region21
    $region20: #{tpu_custom_call.1} parent=1 // pred_region
      _
    $region21: #{tpu_custom_call.1} parent=1 // pred_fallthru
      _
    // Predicated region
    $region22: #{tpu_custom_call.1} parent=1 // pred_check
      _
    $region23: #{tpu_custom_call.1} parent=1 // pred_check_branch
      %32 = sbr.rel (0) target = $region25
    $region24: #{tpu_custom_call.1} parent=1 // pred_region
      _
    $region25: #{tpu_custom_call.1} parent=1 // pred_fallthru
      _
    // Predicated region
    $region26: #{tpu_custom_call.1} parent=1 // pred_check
      _
    $region27: #{tpu_custom_call.1} parent=1 // pred_check_branch
      %34 = sbr.rel (0) target = $region29
    $region28: #{tpu_custom_call.1} parent=1 // pred_region
      _
    $region29: #{tpu_custom_call.1} parent=1 // pred_fallthru
      _
    // Predicated region
    $region30: #{tpu_custom_call.1} parent=1 // pred_check
      _
    $region31: #{tpu_custom_call.1} parent=1 // pred_check_branch
      %36 = sbr.rel (0) target = $region33
    $region32: #{tpu_custom_call.1} parent=1 // pred_region
      _
    $region33: #{tpu_custom_call.1} parent=1 // pred_fallthru
      _
    // Predicated region
    $region34: #{tpu_custom_call.1} parent=1 // pred_check
      _
    $region35: #{tpu_custom_call.1} parent=1 // pred_check_branch
      %38 = sbr.rel (0) target = $region37
    $region36: #{tpu_custom_call.1} parent=1 // pred_region
      _
    $region37: #{tpu_custom_call.1} parent=1 // pred_fallthru
      _
    // Predicated region
    $region38: #{tpu_custom_call.1} parent=1 // pred_check
      _
    $region39: #{tpu_custom_call.1} parent=1 // pred_check_branch
      %40 = sbr.rel (0) target = $region41
    $region40: #{tpu_custom_call.1} parent=1 // pred_region
      _
    $region41: #{tpu_custom_call.1} parent=1 // pred_fallthru
      _
    // Predicated region
    $region42: #{tpu_custom_call.1} parent=1 // pred_check
      _
    $region43: #{tpu_custom_call.1} parent=1 // pred_check_branch
      %42 = sbr.rel (0) target = $region45
    $region44: #{tpu_custom_call.1} parent=1 // pred_region
      _
    $region45: #{tpu_custom_call.1} parent=1 // pred_fallthru
      _
    // Predicated region
    $region46: #{tpu_custom_call.1} parent=1 // pred_check
      _
    $region47: #{tpu_custom_call.1} parent=1 // pred_check_branch
      %44 = sbr.rel (0) target = $region49
    $region48: #{tpu_custom_call.1} parent=1 // pred_region
      _
    $region49: #{tpu_custom_call.1} parent=1 // pred_fallthru
      _
    // Predicated region
    $region50: #{tpu_custom_call.1} parent=1 // pred_check
      _
    $region51: #{tpu_custom_call.1} parent=1 // pred_check_branch
      %46 = sbr.rel (0) target = $region53
    $region52: #{tpu_custom_call.1} parent=1 // pred_region
      _
    $region53: #{tpu_custom_call.1} parent=1 // pred_fallthru
      _
    %v47 = vld [vmem:[%s0] sm:$0x1]
    %v48 = vlaneseq
    %v49 = vand.u32 %v48, 127
    %vm50 = vcmp.lt.s32.totalorder %v49, 0
    %v51 = vsub.s32 0, %v49
    %v52 = vsel %vm50, %v51, %v49
    %v53 = vshrl.u32 %v52, 4
    %v54 = vand.u32 %v52, 15
    %v55 = vsub.s32 0, %v54
    %v56 = vsel %vm50, %v55, %v54
    %vm57 = vcmp.ne.s32.totalorder %v56, 0
    %vm58 = vcmp.lt.s32.totalorder %v56, 0
    %vm59 = vmand %vm58, %vm57
    %v60 = vadd.s32 %v56, 16
    %v61 = vsel %vm59, %v60, %v56
    %vm62 = vcmp.ge.s32.totalorder %v61, 1
    %vm63 = vcmp.lt.s32.totalorder %v61, 15
    %v64 = vsel %vm62, 1, 0
    %vm65 = vcmp.eq.s32.totalorder %v64, 1
    %v66 = vsel %vm63, 1, 0
    %vm67 = vcmp.eq.s32.totalorder %v66, 1
    %vm68 = vcmp.ge.s32.totalorder %v61, 2
    %v69 = vsel %vm68, 1, 0
    %vm70 = vcmp.eq.s32.totalorder %v69, 1
    %vm71 = vcmp.lt.s32.totalorder %v61, 14
    %v72 = vsel %vm71, 1, 0
    %vm73 = vcmp.eq.s32.totalorder %v72, 1
    %vm74 = vcmp.lt.s32.totalorder %v61, 0
    %v75 = vsub.s32 0, %v61
    %v76 = vsel %vm74, %v75, %v61
    %v77 = vshrl.u32 %v76, 1
    %v78 = vand.u32 %v76, 1
    %v79 = vsub.s32 0, %v78
    %v80 = vsel %vm74, %v79, %v78
    %vm81 = vcmp.ne.s32.totalorder %v80, 0
    %vm82 = vcmp.lt.s32.totalorder %v80, 0
    %vm83 = vmand %vm82, %vm81
    %v84 = vadd.s32 %v80, 2
    %v85 = vsel %vm83, %v84, %v80
    %vm86 = vcmp.eq.s32.totalorder %v85, 0
    %v87 = vsel %vm86, 1, 0
    %vm88 = vcmp.eq.s32.totalorder %v87, 1
    %v89 = vld [vmem:[%s1] sm:$0xff]
    %v90 = vld [vmem:[%s1 + $0x8] sm:$0xff]
    %v91 = vld [vmem:[%s1 + $0x10] sm:$0xff]
    %v92 = vld [vmem:[%s1 + $0x18] sm:$0xff]
    %93 = vrot.lane.b32.xlu0 %v47, 1
    %v94 = vpop.permute.xlu0 %93
    %v95 = vsel %vm62, %v94, 0.0
    %97 = vset.pattern.permute.xlu0 0
    %98 = vperm.xlu0 %97, %v89
    %v99 = vpop.permute.xlu0 %98
    %102 = vset.pattern.permute.xlu0 0
    %103 = vperm.xlu0 %102, %v90
    %v104 = vpop.permute.xlu0 %103
    %107 = vset.pattern.permute.xlu0 0
    %108 = vperm.xlu0 %107, %v91
    %v109 = vpop.permute.xlu0 %108
    %112 = vset.pattern.permute.xlu0 0
    %113 = vperm.xlu0 %112, %v92
    %v114 = vpop.permute.xlu0 %113
    %v116 = vlaneseq
    %v117 = vshrl.u32 %v116, 7
    %v118 = vsub.s32 0, %v117
    %v119 = vrot.slane %v95, %v118
    %v120 = vmul.f32 %v99, %v119
    %v121 = vmul.f32 %v104, %v119
    %v122 = vmul.f32 %v109, %v119
    %v123 = vmul.f32 %v114, %v119
    %124 = vset.pattern.permute.xlu0 1
    %125 = vperm.xlu0 %124, %v89
    %v126 = vpop.permute.xlu0 %125
    %128 = vset.pattern.permute.xlu0 1
    %129 = vperm.xlu0 %128, %v90
    %v130 = vpop.permute.xlu0 %129
    %132 = vset.pattern.permute.xlu0 1
    %133 = vperm.xlu0 %132, %v91
    %v134 = vpop.permute.xlu0 %133
    %136 = vset.pattern.permute.xlu0 1
    %137 = vperm.xlu0 %136, %v92
    %v138 = vpop.permute.xlu0 %137
    %v141 = vlaneseq
    %v142 = vshrl.u32 %v141, 7
    %v143 = vsub.s32 0, %v142
    %v144 = vrot.slane %v47, %v143
    %v146 = vmul.f32 %v126, %v144
    %v147 = vmul.f32 %v130, %v144
    %v148 = vmul.f32 %v134, %v144
    %v149 = vmul.f32 %v138, %v144
    %v150 = vadd.f32 %v120, %v146
    %v151 = vadd.f32 %v121, %v147
    %v152 = vadd.f32 %v122, %v148
    %v153 = vadd.f32 %v123, %v149
    %154 = vrot.lane.b32.xlu0 %v47, 127
    %v155 = vpop.permute.xlu0 %154
    %v156 = vsel %vm63, %v155, 0.0
    %157 = vset.pattern.permute.xlu0 2
    %158 = vperm.xlu0 %157, %v89
    %v159 = vpop.permute.xlu0 %158
    %161 = vset.pattern.permute.xlu0 2
    %162 = vperm.xlu0 %161, %v90
    %v163 = vpop.permute.xlu0 %162
    %165 = vset.pattern.permute.xlu0 2
    %166 = vperm.xlu0 %165, %v91
    %v167 = vpop.permute.xlu0 %166
    %169 = vset.pattern.permute.xlu0 2
    %170 = vperm.xlu0 %169, %v92
    %v171 = vpop.permute.xlu0 %170
    %v173 = vlaneseq
    %v174 = vshrl.u32 %v173, 7
    %v175 = vsub.s32 0, %v174
    %v176 = vrot.slane %v156, %v175
    %v177 = vmul.f32 %v159, %v176
    %v178 = vmul.f32 %v163, %v176
    %v179 = vmul.f32 %v167, %v176
    %v180 = vmul.f32 %v171, %v176
    %v181 = vadd.f32 %v150, %v177
    %v182 = vadd.f32 %v151, %v178
    %v183 = vadd.f32 %v152, %v179
    %v184 = vadd.f32 %v153, %v180
    %v185 = vld [vmem:[%s2] sm:$0xff]
    %v186 = vld [vmem:[%s2 + $0x8] sm:$0xff]
    %v187 = vld [vmem:[%s2 + $0x10] sm:$0xff]
    %v188 = vld [vmem:[%s2 + $0x18] sm:$0xff]
    %190 = vset.pattern.permute.xlu0 0
    %191 = vperm.xlu0 %190, %v185
    %v192 = vpop.permute.xlu0 %191
    %195 = vset.pattern.permute.xlu0 0
    %196 = vperm.xlu0 %195, %v186
    %v197 = vpop.permute.xlu0 %196
    %200 = vset.pattern.permute.xlu0 0
    %201 = vperm.xlu0 %200, %v187
    %v202 = vpop.permute.xlu0 %201
    %205 = vset.pattern.permute.xlu0 0
    %206 = vperm.xlu0 %205, %v188
    %v207 = vpop.permute.xlu0 %206
    %v209 = vadd.f32 %v181, %v192
    %v210 = vadd.f32 %v182, %v197
    %v211 = vadd.f32 %v183, %v202
    %v212 = vadd.f32 %v184, %v207
    %v213 = vmax.f32 %v209, 0.0
    %v214 = vmax.f32 %v210, 0.0
    %v215 = vmax.f32 %v211, 0.0
    %v216 = vmax.f32 %v212, 0.0
    %v217 = vld [vmem:[%s3] sm:$0xff]
    %v218 = vld [vmem:[%s3 + $0x8] sm:$0xff]
    %v219 = vld [vmem:[%s3 + $0x10] sm:$0xff]
    %v220 = vld [vmem:[%s3 + $0x18] sm:$0xff]
    %v221 = vld [vmem:[%s3 + $0x20] sm:$0xff]
    %v222 = vld [vmem:[%s3 + $0x28] sm:$0xff]
    %v223 = vld [vmem:[%s3 + $0x30] sm:$0xff]
    %v224 = vld [vmem:[%s3 + $0x38] sm:$0xff]
    %225 = vrot.lane.b32.xlu0 %v213, 1
    %v226 = vpop.permute.xlu0 %225
    %227 = vrot.lane.b32.xlu0 %v214, 1
    %v228 = vpop.permute.xlu0 %227
    %229 = vrot.lane.b32.xlu0 %v215, 1
    %v230 = vpop.permute.xlu0 %229
    %231 = vrot.lane.b32.xlu0 %v216, 1
    %v232 = vpop.permute.xlu0 %231
    %v233 = vsel %vm65, %v226, 0.0
    %v234 = vsel %vm65, %v228, 0.0
    %v235 = vsel %vm65, %v230, 0.0
    %v236 = vsel %vm65, %v232, 0.0
    %s237 = scalar_lea.vmem %s3, 64
    %v238 = vld [vmem:[%s237] sm:$0xff]
    %v239 = vld [vmem:[%s237 + $0x8] sm:$0xff]
    %v240 = vld [vmem:[%s237 + $0x10] sm:$0xff]
    %v241 = vld [vmem:[%s237 + $0x18] sm:$0xff]
    %v242 = vld [vmem:[%s237 + $0x20] sm:$0xff]
    %v243 = vld [vmem:[%s237 + $0x28] sm:$0xff]
    %v244 = vld [vmem:[%s237 + $0x30] sm:$0xff]
    %v245 = vld [vmem:[%s237 + $0x38] sm:$0xff]
    %vm246 = vcmask 261120
    %v248 = vsel %vm246, %v238, 0
    %v251 = vsel %vm246, %v239, 0
    %v254 = vsel %vm246, %v240, 0
    %v257 = vsel %vm246, %v241, 0
    %v260 = vsel %vm246, %v242, 0
    %v263 = vsel %vm246, %v243, 0
    %v266 = vsel %vm246, %v244, 0
    %v269 = vsel %vm246, %v245, 0
    %271 = vmatprep.subr.mxu0 0.0
    %272 = vmatpush1.msra.mxu0 %v213
    %273 = vmatprep.subr.mxu0 0.0
    %274 = vmatpush1.msra.mxu0 %v214
    %275 = vmatprep.subr.mxu0 0.0
    %276 = vmatpush1.msra.mxu0 %v215
    %277 = vmatprep.subr.mxu0 0.0
    %278 = vmatpush1.msra.mxu0 %v216
    %279 = vmatprep.subr.mxu0 0.0
    %280 = vmatpush1.msra.mxu0 0.0
    %281 = vmatprep.subr.mxu0 0.0
    %282 = vmatpush1.msra.mxu0 0.0
    %283 = vmatprep.subr.mxu0 0.0
    %284 = vmatpush1.msra.mxu0 0.0
    %285 = vmatprep.subr.mxu0 0.0
    %286 = vmatpush1.msra.mxu0 0.0
    %287 = vmatprep.subr.mxu0 0.0
    %288 = vmatpush1.msra.mxu0 0.0
    %289 = vmatprep.subr.mxu0 0.0
    %290 = vmatpush1.msra.mxu0 0.0
    %291 = vmatprep.subr.mxu0 0.0
    %292 = vmatpush1.msra.mxu0 0.0
    %293 = vmatprep.subr.mxu0 0.0
    %294 = vmatpush1.msra.mxu0 0.0
    %295 = vmatprep.subr.mxu0 0.0
    %296 = vmatpush1.msra.mxu0 0.0
    %297 = vmatprep.subr.mxu0 0.0
    %298 = vmatpush1.msra.mxu0 0.0
    %299 = vmatprep.subr.mxu0 0.0
    %300 = vmatpush1.msra.mxu0 0.0
    %301 = vmatprep.subr.mxu0 0.0
    %302 = vmatpush1.msra.mxu0 0.0
    %303 = vmatprep.subr.mxu0 0.0
    %304 = vmatpush1.msra.mxu0 0.0
    %305 = vmatprep.subr.mxu0 0.0
    %306 = vmatpush1.msra.mxu0 0.0
    %307 = vmatprep.subr.mxu0 0.0
    %308 = vmatpush1.msra.mxu0 0.0
    %309 = vmatprep.subr.mxu0 0.0
    %310 = vmatpush1.msra.mxu0 0.0
    %311 = vmatprep.subr.mxu0 0.0
    %312 = vmatpush1.msra.mxu0 0.0
    %313 = vmatprep.subr.mxu0 0.0
    %314 = vmatpush1.msra.mxu0 0.0
    %315 = vmatprep.subr.mxu0 0.0
    %316 = vmatpush1.msra.mxu0 0.0
    %317 = vmatprep.subr.mxu0 0.0
    %318 = vmatpush1.msra.mxu0 0.0
    %319 = vmatprep.subr.mxu0 0.0
    %320 = vmatpush1.msra.mxu0 0.0
    %321 = vmatprep.subr.mxu0 0.0
    %322 = vmatpush1.msra.mxu0 0.0
    %323 = vmatprep.subr.mxu0 0.0
    %324 = vmatpush1.msra.mxu0 0.0
    %325 = vmatprep.subr.mxu0 0.0
    %326 = vmatpush1.msra.mxu0 0.0
    %327 = vmatprep.subr.mxu0 0.0
    %328 = vmatpush1.msra.mxu0 0.0
    %329 = vmatprep.subr.mxu0 0.0
    %330 = vmatpush1.msra.mxu0 0.0
    %331 = vmatprep.subr.mxu0 0.0
    %332 = vmatpush1.msra.mxu0 0.0
    %333 = vmatprep.subr.mxu0 0.0
    %334 = vmatpush1.msra.mxu0 0.0
    %335 = vmatprep.mubr.f32.mxu0 0.0
    %336 = vmatmul.mubr.f32.gmra.mrb[0].mxu0 %v248
    %v337 = vpop.f32.mrb[0].mxu0
    %v338 = vadd.f32 0.0, %v337
    %v339 = vpop.f32.mrb[0].mxu0
    %340 = vmatprep.mubr.f32.mxu0 0.0
    %341 = vmatmul.mubr.f32.gmra.mrb[0].mxu0 %v251
    %v342 = vpop.f32.mrb[0].mxu0
    %v343 = vadd.f32 0.0, %v342
    %v344 = vpop.f32.mrb[0].mxu0
    %345 = vmatprep.mubr.f32.mxu0 0.0
    %346 = vmatmul.mubr.f32.gmra.mrb[0].mxu0 %v254
    %v347 = vpop.f32.mrb[0].mxu0
    %v348 = vadd.f32 0.0, %v347
    %v349 = vpop.f32.mrb[0].mxu0
    %350 = vmatprep.mubr.f32.mxu0 0.0
    %351 = vmatmul.mubr.f32.gmra.mrb[0].mxu0 %v257
    %v352 = vpop.f32.mrb[0].mxu0
    %v353 = vadd.f32 0.0, %v352
    %v354 = vpop.f32.mrb[0].mxu0
    %355 = vmatprep.mubr.f32.mxu0 0.0
    %356 = vmatmul.mubr.f32.gmra.mrb[0].mxu0 %v260
    %v357 = vpop.f32.mrb[0].mxu0
    %v358 = vadd.f32 0.0, %v357
    %v359 = vpop.f32.mrb[0].mxu0
    %360 = vmatprep.mubr.f32.mxu0 0.0
    %361 = vmatmul.mubr.f32.gmra.mrb[0].mxu0 %v263
    %v362 = vpop.f32.mrb[0].mxu0
    %v363 = vadd.f32 0.0, %v362
    %v364 = vpop.f32.mrb[0].mxu0
    %365 = vmatprep.mubr.f32.mxu0 0.0
    %366 = vmatmul.mubr.f32.gmra.mrb[0].mxu0 %v266
    %v367 = vpop.f32.mrb[0].mxu0
    %v368 = vadd.f32 0.0, %v367
    %v369 = vpop.f32.mrb[0].mxu0
    %370 = vmatprep.mubr.f32.mxu0 0.0
    %371 = vmatmul.mubr.f32.gmra.mrb[0].mxu0 %v269
    %v372 = vpop.f32.mrb[0].mxu0
    %v373 = vadd.f32 0.0, %v372
    %v374 = vpop.f32.mrb[0].mxu0
    %375 = vdwg.mxu0
    %v377 = vsel %vm246, %v217, 0
    %v380 = vsel %vm246, %v218, 0
    %v383 = vsel %vm246, %v219, 0
    %v386 = vsel %vm246, %v220, 0
    %v389 = vsel %vm246, %v221, 0
    %v392 = vsel %vm246, %v222, 0
    %v395 = vsel %vm246, %v223, 0
    %v398 = vsel %vm246, %v224, 0
    %400 = vmatprep.subr.mxu0 0.0
    %401 = vmatpush1.msra.mxu0 %v233
    %402 = vmatprep.subr.mxu0 0.0
    %403 = vmatpush1.msra.mxu0 %v234
    %404 = vmatprep.subr.mxu0 0.0
    %405 = vmatpush1.msra.mxu0 %v235
    %406 = vmatprep.subr.mxu0 0.0
    %407 = vmatpush1.msra.mxu0 %v236
    %408 = vmatprep.subr.mxu0 0.0
    %409 = vmatpush1.msra.mxu0 0.0
    %410 = vmatprep.subr.mxu0 0.0
    %411 = vmatpush1.msra.mxu0 0.0
    %412 = vmatprep.subr.mxu0 0.0
    %413 = vmatpush1.msra.mxu0 0.0
    %414 = vmatprep.subr.mxu0 0.0
    %415 = vmatpush1.msra.mxu0 0.0
    %416 = vmatprep.subr.mxu0 0.0
    %417 = vmatpush1.msra.mxu0 0.0
    %418 = vmatprep.subr.mxu0 0.0
    %419 = vmatpush1.msra.mxu0 0.0
    %420 = vmatprep.subr.mxu0 0.0
    %421 = vmatpush1.msra.mxu0 0.0
    %422 = vmatprep.subr.mxu0 0.0
    %423 = vmatpush1.msra.mxu0 0.0
    %424 = vmatprep.subr.mxu0 0.0
    %425 = vmatpush1.msra.mxu0 0.0
    %426 = vmatprep.subr.mxu0 0.0
    %427 = vmatpush1.msra.mxu0 0.0
    %428 = vmatprep.subr.mxu0 0.0
    %429 = vmatpush1.msra.mxu0 0.0
    %430 = vmatprep.subr.mxu0 0.0
    %431 = vmatpush1.msra.mxu0 0.0
    %432 = vmatprep.subr.mxu0 0.0
    %433 = vmatpush1.msra.mxu0 0.0
    %434 = vmatprep.subr.mxu0 0.0
    %435 = vmatpush1.msra.mxu0 0.0
    %436 = vmatprep.subr.mxu0 0.0
    %437 = vmatpush1.msra.mxu0 0.0
    %438 = vmatprep.subr.mxu0 0.0
    %439 = vmatpush1.msra.mxu0 0.0
    %440 = vmatprep.subr.mxu0 0.0
    %441 = vmatpush1.msra.mxu0 0.0
    %442 = vmatprep.subr.mxu0 0.0
    %443 = vmatpush1.msra.mxu0 0.0
    %444 = vmatprep.subr.mxu0 0.0
    %445 = vmatpush1.msra.mxu0 0.0
    %446 = vmatprep.subr.mxu0 0.0
    %447 = vmatpush1.msra.mxu0 0.0
    %448 = vmatprep.subr.mxu0 0.0
    %449 = vmatpush1.msra.mxu0 0.0
    %450 = vmatprep.subr.mxu0 0.0
    %451 = vmatpush1.msra.mxu0 0.0
    %452 = vmatprep.subr.mxu0 0.0
    %453 = vmatpush1.msra.mxu0 0.0
    %454 = vmatprep.subr.mxu0 0.0
    %455 = vmatpush1.msra.mxu0 0.0
    %456 = vmatprep.subr.mxu0 0.0
    %457 = vmatpush1.msra.mxu0 0.0
    %458 = vmatprep.subr.mxu0 0.0
    %459 = vmatpush1.msra.mxu0 0.0
    %460 = vmatprep.subr.mxu0 0.0
    %461 = vmatpush1.msra.mxu0 0.0
    %462 = vmatprep.subr.mxu0 0.0
    %463 = vmatpush1.msra.mxu0 0.0
    %464 = vmatprep.mubr.f32.mxu0 0.0
    %465 = vmatmul.mubr.f32.gmra.mrb[0].mxu0 %v377
    %v466 = vpop.f32.mrb[0].mxu0
    %v467 = vadd.f32 %v338, %v466
    %v468 = vpop.f32.mrb[0].mxu0
    %469 = vmatprep.mubr.f32.mxu0 0.0
    %470 = vmatmul.mubr.f32.gmra.mrb[0].mxu0 %v380
    %v471 = vpop.f32.mrb[0].mxu0
    %v472 = vadd.f32 %v343, %v471
    %v473 = vpop.f32.mrb[0].mxu0
    %474 = vmatprep.mubr.f32.mxu0 0.0
    %475 = vmatmul.mubr.f32.gmra.mrb[0].mxu0 %v383
    %v476 = vpop.f32.mrb[0].mxu0
    %v477 = vadd.f32 %v348, %v476
    %v478 = vpop.f32.mrb[0].mxu0
    %479 = vmatprep.mubr.f32.mxu0 0.0
    %480 = vmatmul.mubr.f32.gmra.mrb[0].mxu0 %v386
    %v481 = vpop.f32.mrb[0].mxu0
    %v482 = vadd.f32 %v353, %v481
    %v483 = vpop.f32.mrb[0].mxu0
    %484 = vmatprep.mubr.f32.mxu0 0.0
    %485 = vmatmul.mubr.f32.gmra.mrb[0].mxu0 %v389
    %v486 = vpop.f32.mrb[0].mxu0
    %v487 = vadd.f32 %v358, %v486
    %v488 = vpop.f32.mrb[0].mxu0
    %489 = vmatprep.mubr.f32.mxu0 0.0
    %490 = vmatmul.mubr.f32.gmra.mrb[0].mxu0 %v392
    %v491 = vpop.f32.mrb[0].mxu0
    %v492 = vadd.f32 %v363, %v491
    %v493 = vpop.f32.mrb[0].mxu0
    %494 = vmatprep.mubr.f32.mxu0 0.0
    %495 = vmatmul.mubr.f32.gmra.mrb[0].mxu0 %v395
    %v496 = vpop.f32.mrb[0].mxu0
    %v497 = vadd.f32 %v368, %v496
    %v498 = vpop.f32.mrb[0].mxu0
    %499 = vmatprep.mubr.f32.mxu0 0.0
    %500 = vmatmul.mubr.f32.gmra.mrb[0].mxu0 %v398
    %v501 = vpop.f32.mrb[0].mxu0
    %v502 = vadd.f32 %v373, %v501
    %v503 = vpop.f32.mrb[0].mxu0
    %504 = vdwg.mxu0
    %s505 = scalar_lea.vmem %s3, 128
    %v506 = vld [vmem:[%s505] sm:$0xff]
    %v507 = vld [vmem:[%s505 + $0x8] sm:$0xff]
    %v508 = vld [vmem:[%s505 + $0x10] sm:$0xff]
    %v509 = vld [vmem:[%s505 + $0x18] sm:$0xff]
    %v510 = vld [vmem:[%s505 + $0x20] sm:$0xff]
    %v511 = vld [vmem:[%s505 + $0x28] sm:$0xff]
    %v512 = vld [vmem:[%s505 + $0x30] sm:$0xff]
    %v513 = vld [vmem:[%s505 + $0x38] sm:$0xff]
    %514 = vrot.lane.b32.xlu0 %v213, 127
    %v515 = vpop.permute.xlu0 %514
    %516 = vrot.lane.b32.xlu0 %v214, 127
    %v517 = vpop.permute.xlu0 %516
    %518 = vrot.lane.b32.xlu0 %v215, 127
    %v519 = vpop.permute.xlu0 %518
    %520 = vrot.lane.b32.xlu0 %v216, 127
    %v521 = vpop.permute.xlu0 %520
    %v522 = vsel %vm67, %v515, 0.0
    %v523 = vsel %vm67, %v517, 0.0
    %v524 = vsel %vm67, %v519, 0.0
    %v525 = vsel %vm67, %v521, 0.0
    %v527 = vsel %vm246, %v506, 0
    %v530 = vsel %vm246, %v507, 0
    %v533 = vsel %vm246, %v508, 0
    %v536 = vsel %vm246, %v509, 0
    %v539 = vsel %vm246, %v510, 0
    %v542 = vsel %vm246, %v511, 0
    %v545 = vsel %vm246, %v512, 0
    %v548 = vsel %vm246, %v513, 0
    %550 = vmatprep.subr.mxu0 0.0
    %551 = vmatpush1.msra.mxu0 %v522
    %552 = vmatprep.subr.mxu0 0.0
    %553 = vmatpush1.msra.mxu0 %v523
    %554 = vmatprep.subr.mxu0 0.0
    %555 = vmatpush1.msra.mxu0 %v524
    %556 = vmatprep.subr.mxu0 0.0
    %557 = vmatpush1.msra.mxu0 %v525
    %558 = vmatprep.subr.mxu0 0.0
    %559 = vmatpush1.msra.mxu0 0.0
    %560 = vmatprep.subr.mxu0 0.0
    %561 = vmatpush1.msra.mxu0 0.0
    %562 = vmatprep.subr.mxu0 0.0
    %563 = vmatpush1.msra.mxu0 0.0
    %564 = vmatprep.subr.mxu0 0.0
    %565 = vmatpush1.msra.mxu0 0.0
    %566 = vmatprep.subr.mxu0 0.0
    %567 = vmatpush1.msra.mxu0 0.0
    %568 = vmatprep.subr.mxu0 0.0
    %569 = vmatpush1.msra.mxu0 0.0
    %570 = vmatprep.subr.mxu0 0.0
    %571 = vmatpush1.msra.mxu0 0.0
    %572 = vmatprep.subr.mxu0 0.0
    %573 = vmatpush1.msra.mxu0 0.0
    %574 = vmatprep.subr.mxu0 0.0
    %575 = vmatpush1.msra.mxu0 0.0
    %576 = vmatprep.subr.mxu0 0.0
    %577 = vmatpush1.msra.mxu0 0.0
    %578 = vmatprep.subr.mxu0 0.0
    %579 = vmatpush1.msra.mxu0 0.0
    %580 = vmatprep.subr.mxu0 0.0
    %581 = vmatpush1.msra.mxu0 0.0
    %582 = vmatprep.subr.mxu0 0.0
    %583 = vmatpush1.msra.mxu0 0.0
    %584 = vmatprep.subr.mxu0 0.0
    %585 = vmatpush1.msra.mxu0 0.0
    %586 = vmatprep.subr.mxu0 0.0
    %587 = vmatpush1.msra.mxu0 0.0
    %588 = vmatprep.subr.mxu0 0.0
    %589 = vmatpush1.msra.mxu0 0.0
    %590 = vmatprep.subr.mxu0 0.0
    %591 = vmatpush1.msra.mxu0 0.0
    %592 = vmatprep.subr.mxu0 0.0
    %593 = vmatpush1.msra.mxu0 0.0
    %594 = vmatprep.subr.mxu0 0.0
    %595 = vmatpush1.msra.mxu0 0.0
    %596 = vmatprep.subr.mxu0 0.0
    %597 = vmatpush1.msra.mxu0 0.0
    %598 = vmatprep.subr.mxu0 0.0
    %599 = vmatpush1.msra.mxu0 0.0
    %600 = vmatprep.subr.mxu0 0.0
    %601 = vmatpush1.msra.mxu0 0.0
    %602 = vmatprep.subr.mxu0 0.0
    %603 = vmatpush1.msra.mxu0 0.0
    %604 = vmatprep.subr.mxu0 0.0
    %605 = vmatpush1.msra.mxu0 0.0
    %606 = vmatprep.subr.mxu0 0.0
    %607 = vmatpush1.msra.mxu0 0.0
    %608 = vmatprep.subr.mxu0 0.0
    %609 = vmatpush1.msra.mxu0 0.0
    %610 = vmatprep.subr.mxu0 0.0
    %611 = vmatpush1.msra.mxu0 0.0
    %612 = vmatprep.subr.mxu0 0.0
    %613 = vmatpush1.msra.mxu0 0.0
    %614 = vmatprep.mubr.f32.mxu0 0.0
    %615 = vmatmul.mubr.f32.gmra.mrb[0].mxu0 %v527
    %v616 = vpop.f32.mrb[0].mxu0
    %v617 = vadd.f32 0.0, %v616
    %v618 = vpop.f32.mrb[0].mxu0
    %619 = vmatprep.mubr.f32.mxu0 0.0
    %620 = vmatmul.mubr.f32.gmra.mrb[0].mxu0 %v530
    %v621 = vpop.f32.mrb[0].mxu0
    %v622 = vadd.f32 0.0, %v621
    %v623 = vpop.f32.mrb[0].mxu0
    %624 = vmatprep.mubr.f32.mxu0 0.0
    %625 = vmatmul.mubr.f32.gmra.mrb[0].mxu0 %v533
    %v626 = vpop.f32.mrb[0].mxu0
    %v627 = vadd.f32 0.0, %v626
    %v628 = vpop.f32.mrb[0].mxu0
    %629 = vmatprep.mubr.f32.mxu0 0.0
    %630 = vmatmul.mubr.f32.gmra.mrb[0].mxu0 %v536
    %v631 = vpop.f32.mrb[0].mxu0
    %v632 = vadd.f32 0.0, %v631
    %v633 = vpop.f32.mrb[0].mxu0
    %634 = vmatprep.mubr.f32.mxu0 0.0
    %635 = vmatmul.mubr.f32.gmra.mrb[0].mxu0 %v539
    %v636 = vpop.f32.mrb[0].mxu0
    %v637 = vadd.f32 0.0, %v636
    %v638 = vpop.f32.mrb[0].mxu0
    %639 = vmatprep.mubr.f32.mxu0 0.0
    %640 = vmatmul.mubr.f32.gmra.mrb[0].mxu0 %v542
    %v641 = vpop.f32.mrb[0].mxu0
    %v642 = vadd.f32 0.0, %v641
    %v643 = vpop.f32.mrb[0].mxu0
    %644 = vmatprep.mubr.f32.mxu0 0.0
    %645 = vmatmul.mubr.f32.gmra.mrb[0].mxu0 %v545
    %v646 = vpop.f32.mrb[0].mxu0
    %v647 = vadd.f32 0.0, %v646
    %v648 = vpop.f32.mrb[0].mxu0
    %649 = vmatprep.mubr.f32.mxu0 0.0
    %650 = vmatmul.mubr.f32.gmra.mrb[0].mxu0 %v548
    %v651 = vpop.f32.mrb[0].mxu0
    %v652 = vadd.f32 0.0, %v651
    %v653 = vpop.f32.mrb[0].mxu0
    %654 = vdwg.mxu0
    %v655 = vadd.f32 %v467, %v617
    %v656 = vadd.f32 %v472, %v622
    %v657 = vadd.f32 %v477, %v627
    %v658 = vadd.f32 %v482, %v632
    %v659 = vadd.f32 %v487, %v637
    %v660 = vadd.f32 %v492, %v642
    %v661 = vadd.f32 %v497, %v647
    %v662 = vadd.f32 %v502, %v652
    %v663 = vld [vmem:[%s4] sm:$0xff]
    %v664 = vld [vmem:[%s4 + $0x8] sm:$0xff]
    %v665 = vld [vmem:[%s4 + $0x10] sm:$0xff]
    %v666 = vld [vmem:[%s4 + $0x18] sm:$0xff]
    %v667 = vld [vmem:[%s4 + $0x20] sm:$0xff]
    %v668 = vld [vmem:[%s4 + $0x28] sm:$0xff]
    %v669 = vld [vmem:[%s4 + $0x30] sm:$0xff]
    %v670 = vld [vmem:[%s4 + $0x38] sm:$0xff]
    %672 = vset.pattern.permute.xlu0 0
    %673 = vperm.xlu0 %672, %v663
    %v674 = vpop.permute.xlu0 %673
    %677 = vset.pattern.permute.xlu0 0
    %678 = vperm.xlu0 %677, %v664
    %v679 = vpop.permute.xlu0 %678
    %682 = vset.pattern.permute.xlu0 0
    %683 = vperm.xlu0 %682, %v665
    %v684 = vpop.permute.xlu0 %683
    %687 = vset.pattern.permute.xlu0 0
    %688 = vperm.xlu0 %687, %v666
    %v689 = vpop.permute.xlu0 %688
    %692 = vset.pattern.permute.xlu0 0
    %693 = vperm.xlu0 %692, %v667
    %v694 = vpop.permute.xlu0 %693
    %697 = vset.pattern.permute.xlu0 0
    %698 = vperm.xlu0 %697, %v668
    %v699 = vpop.permute.xlu0 %698
    %702 = vset.pattern.permute.xlu0 0
    %703 = vperm.xlu0 %702, %v669
    %v704 = vpop.permute.xlu0 %703
    %707 = vset.pattern.permute.xlu0 0
    %708 = vperm.xlu0 %707, %v670
    %v709 = vpop.permute.xlu0 %708
    %v711 = vadd.f32 %v655, %v674
    %v712 = vadd.f32 %v656, %v679
    %v713 = vadd.f32 %v657, %v684
    %v714 = vadd.f32 %v658, %v689
    %v715 = vadd.f32 %v659, %v694
    %v716 = vadd.f32 %v660, %v699
    %v717 = vadd.f32 %v661, %v704
    %v718 = vadd.f32 %v662, %v709
    %v719 = vmax.f32 %v711, 0.0
    %v720 = vmax.f32 %v712, 0.0
    %v721 = vmax.f32 %v713, 0.0
    %v722 = vmax.f32 %v714, 0.0
    %v723 = vmax.f32 %v715, 0.0
    %v724 = vmax.f32 %v716, 0.0
    %v725 = vmax.f32 %v717, 0.0
    %v726 = vmax.f32 %v718, 0.0
    %727 = vrot.lane.b32.xlu0 %v719, 127
    %v728 = vpop.permute.xlu0 %727
    %729 = vrot.lane.b32.xlu0 %v720, 127
    %v730 = vpop.permute.xlu0 %729
    %731 = vrot.lane.b32.xlu0 %v721, 127
    %v732 = vpop.permute.xlu0 %731
    %733 = vrot.lane.b32.xlu0 %v722, 127
    %v734 = vpop.permute.xlu0 %733
    %735 = vrot.lane.b32.xlu0 %v723, 127
    %v736 = vpop.permute.xlu0 %735
    %737 = vrot.lane.b32.xlu0 %v724, 127
    %v738 = vpop.permute.xlu0 %737
    %739 = vrot.lane.b32.xlu0 %v725, 127
    %v740 = vpop.permute.xlu0 %739
    %741 = vrot.lane.b32.xlu0 %v726, 127
    %v742 = vpop.permute.xlu0 %741
    %v743 = vsel %vm67, %v728, 0.0
    %v744 = vsel %vm67, %v730, 0.0
    %v745 = vsel %vm67, %v732, 0.0
    %v746 = vsel %vm67, %v734, 0.0
    %v747 = vsel %vm67, %v736, 0.0
    %v748 = vsel %vm67, %v738, 0.0
    %v749 = vsel %vm67, %v740, 0.0
    %v750 = vsel %vm67, %v742, 0.0
    %v751 = vmax.f32 %v719, %v743
    %v752 = vmax.f32 %v720, %v744
    %v753 = vmax.f32 %v721, %v745
    %v754 = vmax.f32 %v722, %v746
    %v755 = vmax.f32 %v723, %v747
    %v756 = vmax.f32 %v724, %v748
    %v757 = vmax.f32 %v725, %v749
    %v758 = vmax.f32 %v726, %v750
    %v759 = vld [vmem:[%s5] sm:$0xff]
    %760 = vrot.lane.b32.xlu0 %v751, 2
    %v761 = vpop.permute.xlu0 %760
    %762 = vrot.lane.b32.xlu0 %v752, 2
    %v763 = vpop.permute.xlu0 %762
    %764 = vrot.lane.b32.xlu0 %v753, 2
    %v765 = vpop.permute.xlu0 %764
    %766 = vrot.lane.b32.xlu0 %v754, 2
    %v767 = vpop.permute.xlu0 %766
    %768 = vrot.lane.b32.xlu0 %v755, 2
    %v769 = vpop.permute.xlu0 %768
    %770 = vrot.lane.b32.xlu0 %v756, 2
    %v771 = vpop.permute.xlu0 %770
    %772 = vrot.lane.b32.xlu0 %v757, 2
    %v773 = vpop.permute.xlu0 %772
    %774 = vrot.lane.b32.xlu0 %v758, 2
    %v775 = vpop.permute.xlu0 %774
    %v776 = vsel %vm70, %v761, 0.0
    %v777 = vsel %vm70, %v763, 0.0
    %v778 = vsel %vm70, %v765, 0.0
    %v779 = vsel %vm70, %v767, 0.0
    %v780 = vsel %vm70, %v769, 0.0
    %v781 = vsel %vm70, %v771, 0.0
    %v782 = vsel %vm70, %v773, 0.0
    %v783 = vsel %vm70, %v775, 0.0
    %s784 = scalar_lea.vmem %s5, 8
    %v785 = vld [vmem:[%s784] sm:$0xff]
    %vm786 = vcmask 523264
    %v788 = vsel %vm786, %v785, 0
    %790 = vmatprep.subr.mxu0 0.0
    %791 = vmatpush1.msra.mxu0 %v751
    %792 = vmatprep.subr.mxu0 0.0
    %793 = vmatpush1.msra.mxu0 %v752
    %794 = vmatprep.subr.mxu0 0.0
    %795 = vmatpush1.msra.mxu0 %v753
    %796 = vmatprep.subr.mxu0 0.0
    %797 = vmatpush1.msra.mxu0 %v754
    %798 = vmatprep.subr.mxu0 0.0
    %799 = vmatpush1.msra.mxu0 %v755
    %800 = vmatprep.subr.mxu0 0.0
    %801 = vmatpush1.msra.mxu0 %v756
    %802 = vmatprep.subr.mxu0 0.0
    %803 = vmatpush1.msra.mxu0 %v757
    %804 = vmatprep.subr.mxu0 0.0
    %805 = vmatpush1.msra.mxu0 %v758
    %806 = vmatprep.subr.mxu0 0.0
    %807 = vmatpush1.msra.mxu0 0.0
    %808 = vmatprep.subr.mxu0 0.0
    %809 = vmatpush1.msra.mxu0 0.0
    %810 = vmatprep.subr.mxu0 0.0
    %811 = vmatpush1.msra.mxu0 0.0
    %812 = vmatprep.subr.mxu0 0.0
    %813 = vmatpush1.msra.mxu0 0.0
    %814 = vmatprep.subr.mxu0 0.0
    %815 = vmatpush1.msra.mxu0 0.0
    %816 = vmatprep.subr.mxu0 0.0
    %817 = vmatpush1.msra.mxu0 0.0
    %818 = vmatprep.subr.mxu0 0.0
    %819 = vmatpush1.msra.mxu0 0.0
    %820 = vmatprep.subr.mxu0 0.0
    %821 = vmatpush1.msra.mxu0 0.0
    %822 = vmatprep.subr.mxu0 0.0
    %823 = vmatpush1.msra.mxu0 0.0
    %824 = vmatprep.subr.mxu0 0.0
    %825 = vmatpush1.msra.mxu0 0.0
    %826 = vmatprep.subr.mxu0 0.0
    %827 = vmatpush1.msra.mxu0 0.0
    %828 = vmatprep.subr.mxu0 0.0
    %829 = vmatpush1.msra.mxu0 0.0
    %830 = vmatprep.subr.mxu0 0.0
    %831 = vmatpush1.msra.mxu0 0.0
    %832 = vmatprep.subr.mxu0 0.0
    %833 = vmatpush1.msra.mxu0 0.0
    %834 = vmatprep.subr.mxu0 0.0
    %835 = vmatpush1.msra.mxu0 0.0
    %836 = vmatprep.subr.mxu0 0.0
    %837 = vmatpush1.msra.mxu0 0.0
    %838 = vmatprep.subr.mxu0 0.0
    %839 = vmatpush1.msra.mxu0 0.0
    %840 = vmatprep.subr.mxu0 0.0
    %841 = vmatpush1.msra.mxu0 0.0
    %842 = vmatprep.subr.mxu0 0.0
    %843 = vmatpush1.msra.mxu0 0.0
    %844 = vmatprep.subr.mxu0 0.0
    %845 = vmatpush1.msra.mxu0 0.0
    %846 = vmatprep.subr.mxu0 0.0
    %847 = vmatpush1.msra.mxu0 0.0
    %848 = vmatprep.subr.mxu0 0.0
    %849 = vmatpush1.msra.mxu0 0.0
    %850 = vmatprep.subr.mxu0 0.0
    %851 = vmatpush1.msra.mxu0 0.0
    %852 = vmatprep.subr.mxu0 0.0
    %853 = vmatpush1.msra.mxu0 0.0
    %854 = vmatprep.mubr.f32.mxu0 0.0
    %855 = vmatmul.mubr.f32.gmra.mrb[0].mxu0 %v788
    %v856 = vpop.f32.mrb[0].mxu0
    %v857 = vadd.f32 0.0, %v856
    %v858 = vpop.f32.mrb[0].mxu0
    %859 = vdwg.mxu0
    %v861 = vsel %vm786, %v759, 0
    %863 = vmatprep.subr.mxu0 0.0
    %864 = vmatpush1.msra.mxu0 %v776
    %865 = vmatprep.subr.mxu0 0.0
    %866 = vmatpush1.msra.mxu0 %v777
    %867 = vmatprep.subr.mxu0 0.0
    %868 = vmatpush1.msra.mxu0 %v778
    %869 = vmatprep.subr.mxu0 0.0
    %870 = vmatpush1.msra.mxu0 %v779
    %871 = vmatprep.subr.mxu0 0.0
    %872 = vmatpush1.msra.mxu0 %v780
    %873 = vmatprep.subr.mxu0 0.0
    %874 = vmatpush1.msra.mxu0 %v781
    %875 = vmatprep.subr.mxu0 0.0
    %876 = vmatpush1.msra.mxu0 %v782
    %877 = vmatprep.subr.mxu0 0.0
    %878 = vmatpush1.msra.mxu0 %v783
    %879 = vmatprep.subr.mxu0 0.0
    %880 = vmatpush1.msra.mxu0 0.0
    %881 = vmatprep.subr.mxu0 0.0
    %882 = vmatpush1.msra.mxu0 0.0
    %883 = vmatprep.subr.mxu0 0.0
    %884 = vmatpush1.msra.mxu0 0.0
    %885 = vmatprep.subr.mxu0 0.0
    %886 = vmatpush1.msra.mxu0 0.0
    %887 = vmatprep.subr.mxu0 0.0
    %888 = vmatpush1.msra.mxu0 0.0
    %889 = vmatprep.subr.mxu0 0.0
    %890 = vmatpush1.msra.mxu0 0.0
    %891 = vmatprep.subr.mxu0 0.0
    %892 = vmatpush1.msra.mxu0 0.0
    %893 = vmatprep.subr.mxu0 0.0
    %894 = vmatpush1.msra.mxu0 0.0
    %895 = vmatprep.subr.mxu0 0.0
    %896 = vmatpush1.msra.mxu0 0.0
    %897 = vmatprep.subr.mxu0 0.0
    %898 = vmatpush1.msra.mxu0 0.0
    %899 = vmatprep.subr.mxu0 0.0
    %900 = vmatpush1.msra.mxu0 0.0
    %901 = vmatprep.subr.mxu0 0.0
    %902 = vmatpush1.msra.mxu0 0.0
    %903 = vmatprep.subr.mxu0 0.0
    %904 = vmatpush1.msra.mxu0 0.0
    %905 = vmatprep.subr.mxu0 0.0
    %906 = vmatpush1.msra.mxu0 0.0
    %907 = vmatprep.subr.mxu0 0.0
    %908 = vmatpush1.msra.mxu0 0.0
    %909 = vmatprep.subr.mxu0 0.0
    %910 = vmatpush1.msra.mxu0 0.0
    %911 = vmatprep.subr.mxu0 0.0
    %912 = vmatpush1.msra.mxu0 0.0
    %913 = vmatprep.subr.mxu0 0.0
    %914 = vmatpush1.msra.mxu0 0.0
    %915 = vmatprep.subr.mxu0 0.0
    %916 = vmatpush1.msra.mxu0 0.0
    %917 = vmatprep.subr.mxu0 0.0
    %918 = vmatpush1.msra.mxu0 0.0
    %919 = vmatprep.subr.mxu0 0.0
    %920 = vmatpush1.msra.mxu0 0.0
    %921 = vmatprep.subr.mxu0 0.0
    %922 = vmatpush1.msra.mxu0 0.0
    %923 = vmatprep.subr.mxu0 0.0
    %924 = vmatpush1.msra.mxu0 0.0
    %925 = vmatprep.subr.mxu0 0.0
    %926 = vmatpush1.msra.mxu0 0.0
    %927 = vmatprep.mubr.f32.mxu0 0.0
    %928 = vmatmul.mubr.f32.gmra.mrb[0].mxu0 %v861
    %v929 = vpop.f32.mrb[0].mxu0
    %v930 = vadd.f32 %v857, %v929
    %v931 = vpop.f32.mrb[0].mxu0
    %932 = vdwg.mxu0
    %s933 = scalar_lea.vmem %s5, 16
    %v934 = vld [vmem:[%s933] sm:$0xff]
    %935 = vrot.lane.b32.xlu0 %v751, 126
    %v936 = vpop.permute.xlu0 %935
    %937 = vrot.lane.b32.xlu0 %v752, 126
    %v938 = vpop.permute.xlu0 %937
    %939 = vrot.lane.b32.xlu0 %v753, 126
    %v940 = vpop.permute.xlu0 %939
    %941 = vrot.lane.b32.xlu0 %v754, 126
    %v942 = vpop.permute.xlu0 %941
    %943 = vrot.lane.b32.xlu0 %v755, 126
    %v944 = vpop.permute.xlu0 %943
    %945 = vrot.lane.b32.xlu0 %v756, 126
    %v946 = vpop.permute.xlu0 %945
    %947 = vrot.lane.b32.xlu0 %v757, 126
    %v948 = vpop.permute.xlu0 %947
    %949 = vrot.lane.b32.xlu0 %v758, 126
    %v950 = vpop.permute.xlu0 %949
    %v951 = vsel %vm73, %v936, 0.0
    %v952 = vsel %vm73, %v938, 0.0
    %v953 = vsel %vm73, %v940, 0.0
    %v954 = vsel %vm73, %v942, 0.0
    %v955 = vsel %vm73, %v944, 0.0
    %v956 = vsel %vm73, %v946, 0.0
    %v957 = vsel %vm73, %v948, 0.0
    %v958 = vsel %vm73, %v950, 0.0
    %v960 = vsel %vm786, %v934, 0
    %962 = vmatprep.subr.mxu0 0.0
    %963 = vmatpush1.msra.mxu0 %v951
    %964 = vmatprep.subr.mxu0 0.0
    %965 = vmatpush1.msra.mxu0 %v952
    %966 = vmatprep.subr.mxu0 0.0
    %967 = vmatpush1.msra.mxu0 %v953
    %968 = vmatprep.subr.mxu0 0.0
    %969 = vmatpush1.msra.mxu0 %v954
    %970 = vmatprep.subr.mxu0 0.0
    %971 = vmatpush1.msra.mxu0 %v955
    %972 = vmatprep.subr.mxu0 0.0
    %973 = vmatpush1.msra.mxu0 %v956
    %974 = vmatprep.subr.mxu0 0.0
    %975 = vmatpush1.msra.mxu0 %v957
    %976 = vmatprep.subr.mxu0 0.0
    %977 = vmatpush1.msra.mxu0 %v958
    %978 = vmatprep.subr.mxu0 0.0
    %979 = vmatpush1.msra.mxu0 0.0
    %980 = vmatprep.subr.mxu0 0.0
    %981 = vmatpush1.msra.mxu0 0.0
    %982 = vmatprep.subr.mxu0 0.0
    %983 = vmatpush1.msra.mxu0 0.0
    %984 = vmatprep.subr.mxu0 0.0
    %985 = vmatpush1.msra.mxu0 0.0
    %986 = vmatprep.subr.mxu0 0.0
    %987 = vmatpush1.msra.mxu0 0.0
    %988 = vmatprep.subr.mxu0 0.0
    %989 = vmatpush1.msra.mxu0 0.0
    %990 = vmatprep.subr.mxu0 0.0
    %991 = vmatpush1.msra.mxu0 0.0
    %992 = vmatprep.subr.mxu0 0.0
    %993 = vmatpush1.msra.mxu0 0.0
    %994 = vmatprep.subr.mxu0 0.0
    %995 = vmatpush1.msra.mxu0 0.0
    %996 = vmatprep.subr.mxu0 0.0
    %997 = vmatpush1.msra.mxu0 0.0
    %998 = vmatprep.subr.mxu0 0.0
    %999 = vmatpush1.msra.mxu0 0.0
    %1000 = vmatprep.subr.mxu0 0.0
    %1001 = vmatpush1.msra.mxu0 0.0
    %1002 = vmatprep.subr.mxu0 0.0
    %1003 = vmatpush1.msra.mxu0 0.0
    %1004 = vmatprep.subr.mxu0 0.0
    %1005 = vmatpush1.msra.mxu0 0.0
    %1006 = vmatprep.subr.mxu0 0.0
    %1007 = vmatpush1.msra.mxu0 0.0
    %1008 = vmatprep.subr.mxu0 0.0
    %1009 = vmatpush1.msra.mxu0 0.0
    %1010 = vmatprep.subr.mxu0 0.0
    %1011 = vmatpush1.msra.mxu0 0.0
    %1012 = vmatprep.subr.mxu0 0.0
    %1013 = vmatpush1.msra.mxu0 0.0
    %1014 = vmatprep.subr.mxu0 0.0
    %1015 = vmatpush1.msra.mxu0 0.0
    %1016 = vmatprep.subr.mxu0 0.0
    %1017 = vmatpush1.msra.mxu0 0.0
    %1018 = vmatprep.subr.mxu0 0.0
    %1019 = vmatpush1.msra.mxu0 0.0
    %1020 = vmatprep.subr.mxu0 0.0
    %1021 = vmatpush1.msra.mxu0 0.0
    %1022 = vmatprep.subr.mxu0 0.0
    %1023 = vmatpush1.msra.mxu0 0.0
    %1024 = vmatprep.subr.mxu0 0.0
    %1025 = vmatpush1.msra.mxu0 0.0
    %1026 = vmatprep.mubr.f32.mxu0 0.0
    %1027 = vmatmul.mubr.f32.gmra.mrb[0].mxu0 %v960
    %v1028 = vpop.f32.mrb[0].mxu0
    %v1029 = vadd.f32 0.0, %v1028
    %v1030 = vpop.f32.mrb[0].mxu0
    %1031 = vdwg.mxu0
    %v1032 = vadd.f32 %v930, %v1029
    %v1033 = vld [vmem:[%s6] sm:$0xff]
    %1035 = vset.pattern.permute.xlu0 0
    %1036 = vperm.xlu0 %1035, %v1033
    %v1037 = vpop.permute.xlu0 %1036
    %v1039 = vadd.f32 %v1032, %v1037
    %v1040 = vmax.f32 %v1039, 0.0
    %v1041 = vld [vmem:[%s7] sm:$0xff]
    %v1042 = vld [vmem:[%s7 + $0x8] sm:$0xff]
    %v1043 = vld [vmem:[%s7 + $0x10] sm:$0xff]
    %v1044 = vld [vmem:[%s7 + $0x18] sm:$0xff]
    %v1045 = vld [vmem:[%s7 + $0x20] sm:$0xff]
    %v1046 = vld [vmem:[%s7 + $0x28] sm:$0xff]
    %v1047 = vld [vmem:[%s7 + $0x30] sm:$0xff]
    %v1048 = vld [vmem:[%s7 + $0x38] sm:$0xff]
    %vm1049 = vcmask 64512
    %v1051 = vsel %vm1049, %v1041, 0
    %v1054 = vsel %vm1049, %v1042, 0
    %v1057 = vsel %vm1049, %v1043, 0
    %v1060 = vsel %vm1049, %v1044, 0
    %v1063 = vsel %vm1049, %v1045, 0
    %v1066 = vsel %vm1049, %v1046, 0
    %v1069 = vsel %vm1049, %v1047, 0
    %v1072 = vsel %vm1049, %v1048, 0
    %1074 = vmatprep.subr.mxu0 0.0
    %1075 = vmatpush1.msra.mxu0 %v1040
    %1076 = vmatprep.subr.mxu0 0.0
    %1077 = vmatpush1.msra.mxu0 0.0
    %1078 = vmatprep.subr.mxu0 0.0
    %1079 = vmatpush1.msra.mxu0 0.0
    %1080 = vmatprep.subr.mxu0 0.0
    %1081 = vmatpush1.msra.mxu0 0.0
    %1082 = vmatprep.subr.mxu0 0.0
    %1083 = vmatpush1.msra.mxu0 0.0
    %1084 = vmatprep.subr.mxu0 0.0
    %1085 = vmatpush1.msra.mxu0 0.0
    %1086 = vmatprep.subr.mxu0 0.0
    %1087 = vmatpush1.msra.mxu0 0.0
    %1088 = vmatprep.subr.mxu0 0.0
    %1089 = vmatpush1.msra.mxu0 0.0
    %1090 = vmatprep.subr.mxu0 0.0
    %1091 = vmatpush1.msra.mxu0 0.0
    %1092 = vmatprep.subr.mxu0 0.0
    %1093 = vmatpush1.msra.mxu0 0.0
    %1094 = vmatprep.subr.mxu0 0.0
    %1095 = vmatpush1.msra.mxu0 0.0
    %1096 = vmatprep.subr.mxu0 0.0
    %1097 = vmatpush1.msra.mxu0 0.0
    %1098 = vmatprep.subr.mxu0 0.0
    %1099 = vmatpush1.msra.mxu0 0.0
    %1100 = vmatprep.subr.mxu0 0.0
    %1101 = vmatpush1.msra.mxu0 0.0
    %1102 = vmatprep.subr.mxu0 0.0
    %1103 = vmatpush1.msra.mxu0 0.0
    %1104 = vmatprep.subr.mxu0 0.0
    %1105 = vmatpush1.msra.mxu0 0.0
    %1106 = vmatprep.subr.mxu0 0.0
    %1107 = vmatpush1.msra.mxu0 0.0
    %1108 = vmatprep.subr.mxu0 0.0
    %1109 = vmatpush1.msra.mxu0 0.0
    %1110 = vmatprep.subr.mxu0 0.0
    %1111 = vmatpush1.msra.mxu0 0.0
    %1112 = vmatprep.subr.mxu0 0.0
    %1113 = vmatpush1.msra.mxu0 0.0
    %1114 = vmatprep.subr.mxu0 0.0
    %1115 = vmatpush1.msra.mxu0 0.0
    %1116 = vmatprep.subr.mxu0 0.0
    %1117 = vmatpush1.msra.mxu0 0.0
    %1118 = vmatprep.subr.mxu0 0.0
    %1119 = vmatpush1.msra.mxu0 0.0
    %1120 = vmatprep.subr.mxu0 0.0
    %1121 = vmatpush1.msra.mxu0 0.0
    %1122 = vmatprep.subr.mxu0 0.0
    %1123 = vmatpush1.msra.mxu0 0.0
    %1124 = vmatprep.subr.mxu0 0.0
    %1125 = vmatpush1.msra.mxu0 0.0
    %1126 = vmatprep.subr.mxu0 0.0
    %1127 = vmatpush1.msra.mxu0 0.0
    %1128 = vmatprep.subr.mxu0 0.0
    %1129 = vmatpush1.msra.mxu0 0.0
    %1130 = vmatprep.subr.mxu0 0.0
    %1131 = vmatpush1.msra.mxu0 0.0
    %1132 = vmatprep.subr.mxu0 0.0
    %1133 = vmatpush1.msra.mxu0 0.0
    %1134 = vmatprep.subr.mxu0 0.0
    %1135 = vmatpush1.msra.mxu0 0.0
    %1136 = vmatprep.subr.mxu0 0.0
    %1137 = vmatpush1.msra.mxu0 0.0
    %1138 = vmatprep.mubr.f32.mxu0 0.0
    %1139 = vmatmul.mubr.f32.gmra.mrb[0].mxu0 %v1051
    %v1140 = vpop.f32.mrb[0].mxu0
    %v1141 = vadd.f32 0.0, %v1140
    %v1142 = vpop.f32.mrb[0].mxu0
    %1143 = vmatprep.mubr.f32.mxu0 0.0
    %1144 = vmatmul.mubr.f32.gmra.mrb[0].mxu0 %v1054
    %v1145 = vpop.f32.mrb[0].mxu0
    %v1146 = vadd.f32 0.0, %v1145
    %v1147 = vpop.f32.mrb[0].mxu0
    %1148 = vmatprep.mubr.f32.mxu0 0.0
    %1149 = vmatmul.mubr.f32.gmra.mrb[0].mxu0 %v1057
    %v1150 = vpop.f32.mrb[0].mxu0
    %v1151 = vadd.f32 0.0, %v1150
    %v1152 = vpop.f32.mrb[0].mxu0
    %1153 = vmatprep.mubr.f32.mxu0 0.0
    %1154 = vmatmul.mubr.f32.gmra.mrb[0].mxu0 %v1060
    %v1155 = vpop.f32.mrb[0].mxu0
    %v1156 = vadd.f32 0.0, %v1155
    %v1157 = vpop.f32.mrb[0].mxu0
    %1158 = vmatprep.mubr.f32.mxu0 0.0
    %1159 = vmatmul.mubr.f32.gmra.mrb[0].mxu0 %v1063
    %v1160 = vpop.f32.mrb[0].mxu0
    %v1161 = vadd.f32 0.0, %v1160
    %v1162 = vpop.f32.mrb[0].mxu0
    %1163 = vmatprep.mubr.f32.mxu0 0.0
    %1164 = vmatmul.mubr.f32.gmra.mrb[0].mxu0 %v1066
    %v1165 = vpop.f32.mrb[0].mxu0
    %v1166 = vadd.f32 0.0, %v1165
    %v1167 = vpop.f32.mrb[0].mxu0
    %1168 = vmatprep.mubr.f32.mxu0 0.0
    %1169 = vmatmul.mubr.f32.gmra.mrb[0].mxu0 %v1069
    %v1170 = vpop.f32.mrb[0].mxu0
    %v1171 = vadd.f32 0.0, %v1170
    %v1172 = vpop.f32.mrb[0].mxu0
    %1173 = vmatprep.mubr.f32.mxu0 0.0
    %1174 = vmatmul.mubr.f32.gmra.mrb[0].mxu0 %v1072
    %v1175 = vpop.f32.mrb[0].mxu0
    %v1176 = vadd.f32 0.0, %v1175
    %v1177 = vpop.f32.mrb[0].mxu0
    %1178 = vdwg.mxu0
    %s1179 = scalar_lea.vmem %s7, 64
    %v1180 = vld [vmem:[%s1179] sm:$0xff]
    %v1181 = vld [vmem:[%s1179 + $0x8] sm:$0xff]
    %v1182 = vld [vmem:[%s1179 + $0x10] sm:$0xff]
    %v1183 = vld [vmem:[%s1179 + $0x18] sm:$0xff]
    %v1184 = vld [vmem:[%s1179 + $0x20] sm:$0xff]
    %v1185 = vld [vmem:[%s1179 + $0x28] sm:$0xff]
    %v1186 = vld [vmem:[%s1179 + $0x30] sm:$0xff]
    %v1187 = vld [vmem:[%s1179 + $0x38] sm:$0xff]
    %v1189 = vsel %vm1049, %v1180, 0
    %v1192 = vsel %vm1049, %v1181, 0
    %v1195 = vsel %vm1049, %v1182, 0
    %v1198 = vsel %vm1049, %v1183, 0
    %v1201 = vsel %vm1049, %v1184, 0
    %v1204 = vsel %vm1049, %v1185, 0
    %v1207 = vsel %vm1049, %v1186, 0
    %v1210 = vsel %vm1049, %v1187, 0
    %1212 = vmatprep.subr.mxu0 0.0
    %1213 = vmatpush1.msra.mxu0 %v1040
    %1214 = vmatprep.subr.mxu0 0.0
    %1215 = vmatpush1.msra.mxu0 0.0
    %1216 = vmatprep.subr.mxu0 0.0
    %1217 = vmatpush1.msra.mxu0 0.0
    %1218 = vmatprep.subr.mxu0 0.0
    %1219 = vmatpush1.msra.mxu0 0.0
    %1220 = vmatprep.subr.mxu0 0.0
    %1221 = vmatpush1.msra.mxu0 0.0
    %1222 = vmatprep.subr.mxu0 0.0
    %1223 = vmatpush1.msra.mxu0 0.0
    %1224 = vmatprep.subr.mxu0 0.0
    %1225 = vmatpush1.msra.mxu0 0.0
    %1226 = vmatprep.subr.mxu0 0.0
    %1227 = vmatpush1.msra.mxu0 0.0
    %1228 = vmatprep.subr.mxu0 0.0
    %1229 = vmatpush1.msra.mxu0 0.0
    %1230 = vmatprep.subr.mxu0 0.0
    %1231 = vmatpush1.msra.mxu0 0.0
    %1232 = vmatprep.subr.mxu0 0.0
    %1233 = vmatpush1.msra.mxu0 0.0
    %1234 = vmatprep.subr.mxu0 0.0
    %1235 = vmatpush1.msra.mxu0 0.0
    %1236 = vmatprep.subr.mxu0 0.0
    %1237 = vmatpush1.msra.mxu0 0.0
    %1238 = vmatprep.subr.mxu0 0.0
    %1239 = vmatpush1.msra.mxu0 0.0
    %1240 = vmatprep.subr.mxu0 0.0
    %1241 = vmatpush1.msra.mxu0 0.0
    %1242 = vmatprep.subr.mxu0 0.0
    %1243 = vmatpush1.msra.mxu0 0.0
    %1244 = vmatprep.subr.mxu0 0.0
    %1245 = vmatpush1.msra.mxu0 0.0
    %1246 = vmatprep.subr.mxu0 0.0
    %1247 = vmatpush1.msra.mxu0 0.0
    %1248 = vmatprep.subr.mxu0 0.0
    %1249 = vmatpush1.msra.mxu0 0.0
    %1250 = vmatprep.subr.mxu0 0.0
    %1251 = vmatpush1.msra.mxu0 0.0
    %1252 = vmatprep.subr.mxu0 0.0
    %1253 = vmatpush1.msra.mxu0 0.0
    %1254 = vmatprep.subr.mxu0 0.0
    %1255 = vmatpush1.msra.mxu0 0.0
    %1256 = vmatprep.subr.mxu0 0.0
    %1257 = vmatpush1.msra.mxu0 0.0
    %1258 = vmatprep.subr.mxu0 0.0
    %1259 = vmatpush1.msra.mxu0 0.0
    %1260 = vmatprep.subr.mxu0 0.0
    %1261 = vmatpush1.msra.mxu0 0.0
    %1262 = vmatprep.subr.mxu0 0.0
    %1263 = vmatpush1.msra.mxu0 0.0
    %1264 = vmatprep.subr.mxu0 0.0
    %1265 = vmatpush1.msra.mxu0 0.0
    %1266 = vmatprep.subr.mxu0 0.0
    %1267 = vmatpush1.msra.mxu0 0.0
    %1268 = vmatprep.subr.mxu0 0.0
    %1269 = vmatpush1.msra.mxu0 0.0
    %1270 = vmatprep.subr.mxu0 0.0
    %1271 = vmatpush1.msra.mxu0 0.0
    %1272 = vmatprep.subr.mxu0 0.0
    %1273 = vmatpush1.msra.mxu0 0.0
    %1274 = vmatprep.subr.mxu0 0.0
    %1275 = vmatpush1.msra.mxu0 0.0
    %1276 = vmatprep.mubr.f32.mxu0 0.0
    %1277 = vmatmul.mubr.f32.gmra.mrb[0].mxu0 %v1189
    %v1278 = vpop.f32.mrb[0].mxu0
    %v1279 = vadd.f32 0.0, %v1278
    %v1280 = vpop.f32.mrb[0].mxu0
    %1281 = vmatprep.mubr.f32.mxu0 0.0
    %1282 = vmatmul.mubr.f32.gmra.mrb[0].mxu0 %v1192
    %v1283 = vpop.f32.mrb[0].mxu0
    %v1284 = vadd.f32 0.0, %v1283
    %v1285 = vpop.f32.mrb[0].mxu0
    %1286 = vmatprep.mubr.f32.mxu0 0.0
    %1287 = vmatmul.mubr.f32.gmra.mrb[0].mxu0 %v1195
    %v1288 = vpop.f32.mrb[0].mxu0
    %v1289 = vadd.f32 0.0, %v1288
    %v1290 = vpop.f32.mrb[0].mxu0
    %1291 = vmatprep.mubr.f32.mxu0 0.0
    %1292 = vmatmul.mubr.f32.gmra.mrb[0].mxu0 %v1198
    %v1293 = vpop.f32.mrb[0].mxu0
    %v1294 = vadd.f32 0.0, %v1293
    %v1295 = vpop.f32.mrb[0].mxu0
    %1296 = vmatprep.mubr.f32.mxu0 0.0
    %1297 = vmatmul.mubr.f32.gmra.mrb[0].mxu0 %v1201
    %v1298 = vpop.f32.mrb[0].mxu0
    %v1299 = vadd.f32 0.0, %v1298
    %v1300 = vpop.f32.mrb[0].mxu0
    %1301 = vmatprep.mubr.f32.mxu0 0.0
    %1302 = vmatmul.mubr.f32.gmra.mrb[0].mxu0 %v1204
    %v1303 = vpop.f32.mrb[0].mxu0
    %v1304 = vadd.f32 0.0, %v1303
    %v1305 = vpop.f32.mrb[0].mxu0
    %1306 = vmatprep.mubr.f32.mxu0 0.0
    %1307 = vmatmul.mubr.f32.gmra.mrb[0].mxu0 %v1207
    %v1308 = vpop.f32.mrb[0].mxu0
    %v1309 = vadd.f32 0.0, %v1308
    %v1310 = vpop.f32.mrb[0].mxu0
    %1311 = vmatprep.mubr.f32.mxu0 0.0
    %1312 = vmatmul.mubr.f32.gmra.mrb[0].mxu0 %v1210
    %v1313 = vpop.f32.mrb[0].mxu0
    %v1314 = vadd.f32 0.0, %v1313
    %v1315 = vpop.f32.mrb[0].mxu0
    %1316 = vdwg.mxu0
    %1317 = vrot.lane.b32.xlu0 %v1279, 1
    %v1318 = vpop.permute.xlu0 %1317
    %1319 = vrot.lane.b32.xlu0 %v1284, 1
    %v1320 = vpop.permute.xlu0 %1319
    %1321 = vrot.lane.b32.xlu0 %v1289, 1
    %v1322 = vpop.permute.xlu0 %1321
    %1323 = vrot.lane.b32.xlu0 %v1294, 1
    %v1324 = vpop.permute.xlu0 %1323
    %1325 = vrot.lane.b32.xlu0 %v1299, 1
    %v1326 = vpop.permute.xlu0 %1325
    %1327 = vrot.lane.b32.xlu0 %v1304, 1
    %v1328 = vpop.permute.xlu0 %1327
    %1329 = vrot.lane.b32.xlu0 %v1309, 1
    %v1330 = vpop.permute.xlu0 %1329
    %1331 = vrot.lane.b32.xlu0 %v1314, 1
    %v1332 = vpop.permute.xlu0 %1331
    %v1333 = vsel %vm65, %v1318, 0.0
    %v1334 = vsel %vm65, %v1320, 0.0
    %v1335 = vsel %vm65, %v1322, 0.0
    %v1336 = vsel %vm65, %v1324, 0.0
    %v1337 = vsel %vm65, %v1326, 0.0
    %v1338 = vsel %vm65, %v1328, 0.0
    %v1339 = vsel %vm65, %v1330, 0.0
    %v1340 = vsel %vm65, %v1332, 0.0
    %v1341 = vsel %vm88, %v1141, %v1333
    %v1342 = vsel %vm88, %v1146, %v1334
    %v1343 = vsel %vm88, %v1151, %v1335
    %v1344 = vsel %vm88, %v1156, %v1336
    %v1345 = vsel %vm88, %v1161, %v1337
    %v1346 = vsel %vm88, %v1166, %v1338
    %v1347 = vsel %vm88, %v1171, %v1339
    %v1348 = vsel %vm88, %v1176, %v1340
    %v1349 = vld [vmem:[%s8] sm:$0xff]
    %v1350 = vld [vmem:[%s8 + $0x8] sm:$0xff]
    %v1351 = vld [vmem:[%s8 + $0x10] sm:$0xff]
    %v1352 = vld [vmem:[%s8 + $0x18] sm:$0xff]
    %v1353 = vld [vmem:[%s8 + $0x20] sm:$0xff]
    %v1354 = vld [vmem:[%s8 + $0x28] sm:$0xff]
    %v1355 = vld [vmem:[%s8 + $0x30] sm:$0xff]
    %v1356 = vld [vmem:[%s8 + $0x38] sm:$0xff]
    %1358 = vset.pattern.permute.xlu0 0
    %1359 = vperm.xlu0 %1358, %v1349
    %v1360 = vpop.permute.xlu0 %1359
    %1363 = vset.pattern.permute.xlu0 0
    %1364 = vperm.xlu0 %1363, %v1350
    %v1365 = vpop.permute.xlu0 %1364
    %1368 = vset.pattern.permute.xlu0 0
    %1369 = vperm.xlu0 %1368, %v1351
    %v1370 = vpop.permute.xlu0 %1369
    %1373 = vset.pattern.permute.xlu0 0
    %1374 = vperm.xlu0 %1373, %v1352
    %v1375 = vpop.permute.xlu0 %1374
    %1378 = vset.pattern.permute.xlu0 0
    %1379 = vperm.xlu0 %1378, %v1353
    %v1380 = vpop.permute.xlu0 %1379
    %1383 = vset.pattern.permute.xlu0 0
    %1384 = vperm.xlu0 %1383, %v1354
    %v1385 = vpop.permute.xlu0 %1384
    %1388 = vset.pattern.permute.xlu0 0
    %1389 = vperm.xlu0 %1388, %v1355
    %v1390 = vpop.permute.xlu0 %1389
    %1393 = vset.pattern.permute.xlu0 0
    %1394 = vperm.xlu0 %1393, %v1356
    %v1395 = vpop.permute.xlu0 %1394
    %v1397 = vadd.f32 %v1341, %v1360
    %v1398 = vadd.f32 %v1342, %v1365
    %v1399 = vadd.f32 %v1343, %v1370
    %v1400 = vadd.f32 %v1344, %v1375
    %v1401 = vadd.f32 %v1345, %v1380
    %v1402 = vadd.f32 %v1346, %v1385
    %v1403 = vadd.f32 %v1347, %v1390
    %v1404 = vadd.f32 %v1348, %v1395
    %v1405 = vmax.f32 %v1397, 0.0
    %v1406 = vmax.f32 %v1398, 0.0
    %v1407 = vmax.f32 %v1399, 0.0
    %v1408 = vmax.f32 %v1400, 0.0
    %v1409 = vmax.f32 %v1401, 0.0
    %v1410 = vmax.f32 %v1402, 0.0
    %v1411 = vmax.f32 %v1403, 0.0
    %v1412 = vmax.f32 %v1404, 0.0
    %v1413 = vld [vmem:[%s9] sm:$0xff]
    %v1414 = vld [vmem:[%s9 + $0x8] sm:$0xff]
    %v1415 = vld [vmem:[%s9 + $0x10] sm:$0xff]
    %v1416 = vld [vmem:[%s9 + $0x18] sm:$0xff]
    %1417 = vrot.lane.b32.xlu0 %v1405, 1
    %v1418 = vpop.permute.xlu0 %1417
    %1419 = vrot.lane.b32.xlu0 %v1406, 1
    %v1420 = vpop.permute.xlu0 %1419
    %1421 = vrot.lane.b32.xlu0 %v1407, 1
    %v1422 = vpop.permute.xlu0 %1421
    %1423 = vrot.lane.b32.xlu0 %v1408, 1
    %v1424 = vpop.permute.xlu0 %1423
    %1425 = vrot.lane.b32.xlu0 %v1409, 1
    %v1426 = vpop.permute.xlu0 %1425
    %1427 = vrot.lane.b32.xlu0 %v1410, 1
    %v1428 = vpop.permute.xlu0 %1427
    %1429 = vrot.lane.b32.xlu0 %v1411, 1
    %v1430 = vpop.permute.xlu0 %1429
    %1431 = vrot.lane.b32.xlu0 %v1412, 1
    %v1432 = vpop.permute.xlu0 %1431
    %v1433 = vsel %vm65, %v1418, 0.0
    %v1434 = vsel %vm65, %v1420, 0.0
    %v1435 = vsel %vm65, %v1422, 0.0
    %v1436 = vsel %vm65, %v1424, 0.0
    %v1437 = vsel %vm65, %v1426, 0.0
    %v1438 = vsel %vm65, %v1428, 0.0
    %v1439 = vsel %vm65, %v1430, 0.0
    %v1440 = vsel %vm65, %v1432, 0.0
    %s1441 = scalar_lea.vmem %s9, 32
    %v1442 = vld [vmem:[%s1441] sm:$0xff]
    %v1443 = vld [vmem:[%s1441 + $0x8] sm:$0xff]
    %v1444 = vld [vmem:[%s1441 + $0x10] sm:$0xff]
    %v1445 = vld [vmem:[%s1441 + $0x18] sm:$0xff]
    %v1447 = vsel %vm786, %v1442, 0
    %v1450 = vsel %vm786, %v1443, 0
    %v1453 = vsel %vm786, %v1444, 0
    %v1456 = vsel %vm786, %v1445, 0
    %1458 = vmatprep.subr.mxu0 0.0
    %1459 = vmatpush1.msra.mxu0 %v1405
    %1460 = vmatprep.subr.mxu0 0.0
    %1461 = vmatpush1.msra.mxu0 %v1406
    %1462 = vmatprep.subr.mxu0 0.0
    %1463 = vmatpush1.msra.mxu0 %v1407
    %1464 = vmatprep.subr.mxu0 0.0
    %1465 = vmatpush1.msra.mxu0 %v1408
    %1466 = vmatprep.subr.mxu0 0.0
    %1467 = vmatpush1.msra.mxu0 %v1409
    %1468 = vmatprep.subr.mxu0 0.0
    %1469 = vmatpush1.msra.mxu0 %v1410
    %1470 = vmatprep.subr.mxu0 0.0
    %1471 = vmatpush1.msra.mxu0 %v1411
    %1472 = vmatprep.subr.mxu0 0.0
    %1473 = vmatpush1.msra.mxu0 %v1412
    %1474 = vmatprep.subr.mxu0 0.0
    %1475 = vmatpush1.msra.mxu0 0.0
    %1476 = vmatprep.subr.mxu0 0.0
    %1477 = vmatpush1.msra.mxu0 0.0
    %1478 = vmatprep.subr.mxu0 0.0
    %1479 = vmatpush1.msra.mxu0 0.0
    %1480 = vmatprep.subr.mxu0 0.0
    %1481 = vmatpush1.msra.mxu0 0.0
    %1482 = vmatprep.subr.mxu0 0.0
    %1483 = vmatpush1.msra.mxu0 0.0
    %1484 = vmatprep.subr.mxu0 0.0
    %1485 = vmatpush1.msra.mxu0 0.0
    %1486 = vmatprep.subr.mxu0 0.0
    %1487 = vmatpush1.msra.mxu0 0.0
    %1488 = vmatprep.subr.mxu0 0.0
    %1489 = vmatpush1.msra.mxu0 0.0
    %1490 = vmatprep.subr.mxu0 0.0
    %1491 = vmatpush1.msra.mxu0 0.0
    %1492 = vmatprep.subr.mxu0 0.0
    %1493 = vmatpush1.msra.mxu0 0.0
    %1494 = vmatprep.subr.mxu0 0.0
    %1495 = vmatpush1.msra.mxu0 0.0
    %1496 = vmatprep.subr.mxu0 0.0
    %1497 = vmatpush1.msra.mxu0 0.0
    %1498 = vmatprep.subr.mxu0 0.0
    %1499 = vmatpush1.msra.mxu0 0.0
    %1500 = vmatprep.subr.mxu0 0.0
    %1501 = vmatpush1.msra.mxu0 0.0
    %1502 = vmatprep.subr.mxu0 0.0
    %1503 = vmatpush1.msra.mxu0 0.0
    %1504 = vmatprep.subr.mxu0 0.0
    %1505 = vmatpush1.msra.mxu0 0.0
    %1506 = vmatprep.subr.mxu0 0.0
    %1507 = vmatpush1.msra.mxu0 0.0
    %1508 = vmatprep.subr.mxu0 0.0
    %1509 = vmatpush1.msra.mxu0 0.0
    %1510 = vmatprep.subr.mxu0 0.0
    %1511 = vmatpush1.msra.mxu0 0.0
    %1512 = vmatprep.subr.mxu0 0.0
    %1513 = vmatpush1.msra.mxu0 0.0
    %1514 = vmatprep.subr.mxu0 0.0
    %1515 = vmatpush1.msra.mxu0 0.0
    %1516 = vmatprep.subr.mxu0 0.0
    %1517 = vmatpush1.msra.mxu0 0.0
    %1518 = vmatprep.subr.mxu0 0.0
    %1519 = vmatpush1.msra.mxu0 0.0
    %1520 = vmatprep.subr.mxu0 0.0
    %1521 = vmatpush1.msra.mxu0 0.0
    %1522 = vmatprep.mubr.f32.mxu0 0.0
    %1523 = vmatmul.mubr.f32.gmra.mrb[0].mxu0 %v1447
    %v1524 = vpop.f32.mrb[0].mxu0
    %v1525 = vadd.f32 0.0, %v1524
    %v1526 = vpop.f32.mrb[0].mxu0
    %1527 = vmatprep.mubr.f32.mxu0 0.0
    %1528 = vmatmul.mubr.f32.gmra.mrb[0].mxu0 %v1450
    %v1529 = vpop.f32.mrb[0].mxu0
    %v1530 = vadd.f32 0.0, %v1529
    %v1531 = vpop.f32.mrb[0].mxu0
    %1532 = vmatprep.mubr.f32.mxu0 0.0
    %1533 = vmatmul.mubr.f32.gmra.mrb[0].mxu0 %v1453
    %v1534 = vpop.f32.mrb[0].mxu0
    %v1535 = vadd.f32 0.0, %v1534
    %v1536 = vpop.f32.mrb[0].mxu0
    %1537 = vmatprep.mubr.f32.mxu0 0.0
    %1538 = vmatmul.mubr.f32.gmra.mrb[0].mxu0 %v1456
    %v1539 = vpop.f32.mrb[0].mxu0
    %v1540 = vadd.f32 0.0, %v1539
    %v1541 = vpop.f32.mrb[0].mxu0
    %1542 = vdwg.mxu0
    %v1544 = vsel %vm786, %v1413, 0
    %v1547 = vsel %vm786, %v1414, 0
    %v1550 = vsel %vm786, %v1415, 0
    %v1553 = vsel %vm786, %v1416, 0
    %1555 = vmatprep.subr.mxu0 0.0
    %1556 = vmatpush1.msra.mxu0 %v1433
    %1557 = vmatprep.subr.mxu0 0.0
    %1558 = vmatpush1.msra.mxu0 %v1434
    %1559 = vmatprep.subr.mxu0 0.0
    %1560 = vmatpush1.msra.mxu0 %v1435
    %1561 = vmatprep.subr.mxu0 0.0
    %1562 = vmatpush1.msra.mxu0 %v1436
    %1563 = vmatprep.subr.mxu0 0.0
    %1564 = vmatpush1.msra.mxu0 %v1437
    %1565 = vmatprep.subr.mxu0 0.0
    %1566 = vmatpush1.msra.mxu0 %v1438
    %1567 = vmatprep.subr.mxu0 0.0
    %1568 = vmatpush1.msra.mxu0 %v1439
    %1569 = vmatprep.subr.mxu0 0.0
    %1570 = vmatpush1.msra.mxu0 %v1440
    %1571 = vmatprep.subr.mxu0 0.0
    %1572 = vmatpush1.msra.mxu0 0.0
    %1573 = vmatprep.subr.mxu0 0.0
    %1574 = vmatpush1.msra.mxu0 0.0
    %1575 = vmatprep.subr.mxu0 0.0
    %1576 = vmatpush1.msra.mxu0 0.0
    %1577 = vmatprep.subr.mxu0 0.0
    %1578 = vmatpush1.msra.mxu0 0.0
    %1579 = vmatprep.subr.mxu0 0.0
    %1580 = vmatpush1.msra.mxu0 0.0
    %1581 = vmatprep.subr.mxu0 0.0
    %1582 = vmatpush1.msra.mxu0 0.0
    %1583 = vmatprep.subr.mxu0 0.0
    %1584 = vmatpush1.msra.mxu0 0.0
    %1585 = vmatprep.subr.mxu0 0.0
    %1586 = vmatpush1.msra.mxu0 0.0
    %1587 = vmatprep.subr.mxu0 0.0
    %1588 = vmatpush1.msra.mxu0 0.0
    %1589 = vmatprep.subr.mxu0 0.0
    %1590 = vmatpush1.msra.mxu0 0.0
    %1591 = vmatprep.subr.mxu0 0.0
    %1592 = vmatpush1.msra.mxu0 0.0
    %1593 = vmatprep.subr.mxu0 0.0
    %1594 = vmatpush1.msra.mxu0 0.0
    %1595 = vmatprep.subr.mxu0 0.0
    %1596 = vmatpush1.msra.mxu0 0.0
    %1597 = vmatprep.subr.mxu0 0.0
    %1598 = vmatpush1.msra.mxu0 0.0
    %1599 = vmatprep.subr.mxu0 0.0
    %1600 = vmatpush1.msra.mxu0 0.0
    %1601 = vmatprep.subr.mxu0 0.0
    %1602 = vmatpush1.msra.mxu0 0.0
    %1603 = vmatprep.subr.mxu0 0.0
    %1604 = vmatpush1.msra.mxu0 0.0
    %1605 = vmatprep.subr.mxu0 0.0
    %1606 = vmatpush1.msra.mxu0 0.0
    %1607 = vmatprep.subr.mxu0 0.0
    %1608 = vmatpush1.msra.mxu0 0.0
    %1609 = vmatprep.subr.mxu0 0.0
    %1610 = vmatpush1.msra.mxu0 0.0
    %1611 = vmatprep.subr.mxu0 0.0
    %1612 = vmatpush1.msra.mxu0 0.0
    %1613 = vmatprep.subr.mxu0 0.0
    %1614 = vmatpush1.msra.mxu0 0.0
    %1615 = vmatprep.subr.mxu0 0.0
    %1616 = vmatpush1.msra.mxu0 0.0
    %1617 = vmatprep.subr.mxu0 0.0
    %1618 = vmatpush1.msra.mxu0 0.0
    %1619 = vmatprep.mubr.f32.mxu0 0.0
    %1620 = vmatmul.mubr.f32.gmra.mrb[0].mxu0 %v1544
    %v1621 = vpop.f32.mrb[0].mxu0
    %v1622 = vadd.f32 %v1525, %v1621
    %v1623 = vpop.f32.mrb[0].mxu0
    %1624 = vmatprep.mubr.f32.mxu0 0.0
    %1625 = vmatmul.mubr.f32.gmra.mrb[0].mxu0 %v1547
    %v1626 = vpop.f32.mrb[0].mxu0
    %v1627 = vadd.f32 %v1530, %v1626
    %v1628 = vpop.f32.mrb[0].mxu0
    %1629 = vmatprep.mubr.f32.mxu0 0.0
    %1630 = vmatmul.mubr.f32.gmra.mrb[0].mxu0 %v1550
    %v1631 = vpop.f32.mrb[0].mxu0
    %v1632 = vadd.f32 %v1535, %v1631
    %v1633 = vpop.f32.mrb[0].mxu0
    %1634 = vmatprep.mubr.f32.mxu0 0.0
    %1635 = vmatmul.mubr.f32.gmra.mrb[0].mxu0 %v1553
    %v1636 = vpop.f32.mrb[0].mxu0
    %v1637 = vadd.f32 %v1540, %v1636
    %v1638 = vpop.f32.mrb[0].mxu0
    %1639 = vdwg.mxu0
    %s1640 = scalar_lea.vmem %s9, 64
    %v1641 = vld [vmem:[%s1640] sm:$0xff]
    %v1642 = vld [vmem:[%s1640 + $0x8] sm:$0xff]
    %v1643 = vld [vmem:[%s1640 + $0x10] sm:$0xff]
    %v1644 = vld [vmem:[%s1640 + $0x18] sm:$0xff]
    %1645 = vrot.lane.b32.xlu0 %v1405, 127
    %v1646 = vpop.permute.xlu0 %1645
    %1647 = vrot.lane.b32.xlu0 %v1406, 127
    %v1648 = vpop.permute.xlu0 %1647
    %1649 = vrot.lane.b32.xlu0 %v1407, 127
    %v1650 = vpop.permute.xlu0 %1649
    %1651 = vrot.lane.b32.xlu0 %v1408, 127
    %v1652 = vpop.permute.xlu0 %1651
    %1653 = vrot.lane.b32.xlu0 %v1409, 127
    %v1654 = vpop.permute.xlu0 %1653
    %1655 = vrot.lane.b32.xlu0 %v1410, 127
    %v1656 = vpop.permute.xlu0 %1655
    %1657 = vrot.lane.b32.xlu0 %v1411, 127
    %v1658 = vpop.permute.xlu0 %1657
    %1659 = vrot.lane.b32.xlu0 %v1412, 127
    %v1660 = vpop.permute.xlu0 %1659
    %v1661 = vsel %vm67, %v1646, 0.0
    %v1662 = vsel %vm67, %v1648, 0.0
    %v1663 = vsel %vm67, %v1650, 0.0
    %v1664 = vsel %vm67, %v1652, 0.0
    %v1665 = vsel %vm67, %v1654, 0.0
    %v1666 = vsel %vm67, %v1656, 0.0
    %v1667 = vsel %vm67, %v1658, 0.0
    %v1668 = vsel %vm67, %v1660, 0.0
    %v1670 = vsel %vm786, %v1641, 0
    %v1673 = vsel %vm786, %v1642, 0
    %v1676 = vsel %vm786, %v1643, 0
    %v1679 = vsel %vm786, %v1644, 0
    %1681 = vmatprep.subr.mxu0 0.0
    %1682 = vmatpush1.msra.mxu0 %v1661
    %1683 = vmatprep.subr.mxu0 0.0
    %1684 = vmatpush1.msra.mxu0 %v1662
    %1685 = vmatprep.subr.mxu0 0.0
    %1686 = vmatpush1.msra.mxu0 %v1663
    %1687 = vmatprep.subr.mxu0 0.0
    %1688 = vmatpush1.msra.mxu0 %v1664
    %1689 = vmatprep.subr.mxu0 0.0
    %1690 = vmatpush1.msra.mxu0 %v1665
    %1691 = vmatprep.subr.mxu0 0.0
    %1692 = vmatpush1.msra.mxu0 %v1666
    %1693 = vmatprep.subr.mxu0 0.0
    %1694 = vmatpush1.msra.mxu0 %v1667
    %1695 = vmatprep.subr.mxu0 0.0
    %1696 = vmatpush1.msra.mxu0 %v1668
    %1697 = vmatprep.subr.mxu0 0.0
    %1698 = vmatpush1.msra.mxu0 0.0
    %1699 = vmatprep.subr.mxu0 0.0
    %1700 = vmatpush1.msra.mxu0 0.0
    %1701 = vmatprep.subr.mxu0 0.0
    %1702 = vmatpush1.msra.mxu0 0.0
    %1703 = vmatprep.subr.mxu0 0.0
    %1704 = vmatpush1.msra.mxu0 0.0
    %1705 = vmatprep.subr.mxu0 0.0
    %1706 = vmatpush1.msra.mxu0 0.0
    %1707 = vmatprep.subr.mxu0 0.0
    %1708 = vmatpush1.msra.mxu0 0.0
    %1709 = vmatprep.subr.mxu0 0.0
    %1710 = vmatpush1.msra.mxu0 0.0
    %1711 = vmatprep.subr.mxu0 0.0
    %1712 = vmatpush1.msra.mxu0 0.0
    %1713 = vmatprep.subr.mxu0 0.0
    %1714 = vmatpush1.msra.mxu0 0.0
    %1715 = vmatprep.subr.mxu0 0.0
    %1716 = vmatpush1.msra.mxu0 0.0
    %1717 = vmatprep.subr.mxu0 0.0
    %1718 = vmatpush1.msra.mxu0 0.0
    %1719 = vmatprep.subr.mxu0 0.0
    %1720 = vmatpush1.msra.mxu0 0.0
    %1721 = vmatprep.subr.mxu0 0.0
    %1722 = vmatpush1.msra.mxu0 0.0
    %1723 = vmatprep.subr.mxu0 0.0
    %1724 = vmatpush1.msra.mxu0 0.0
    %1725 = vmatprep.subr.mxu0 0.0
    %1726 = vmatpush1.msra.mxu0 0.0
    %1727 = vmatprep.subr.mxu0 0.0
    %1728 = vmatpush1.msra.mxu0 0.0
    %1729 = vmatprep.subr.mxu0 0.0
    %1730 = vmatpush1.msra.mxu0 0.0
    %1731 = vmatprep.subr.mxu0 0.0
    %1732 = vmatpush1.msra.mxu0 0.0
    %1733 = vmatprep.subr.mxu0 0.0
    %1734 = vmatpush1.msra.mxu0 0.0
    %1735 = vmatprep.subr.mxu0 0.0
    %1736 = vmatpush1.msra.mxu0 0.0
    %1737 = vmatprep.subr.mxu0 0.0
    %1738 = vmatpush1.msra.mxu0 0.0
    %1739 = vmatprep.subr.mxu0 0.0
    %1740 = vmatpush1.msra.mxu0 0.0
    %1741 = vmatprep.subr.mxu0 0.0
    %1742 = vmatpush1.msra.mxu0 0.0
    %1743 = vmatprep.subr.mxu0 0.0
    %1744 = vmatpush1.msra.mxu0 0.0
    %1745 = vmatprep.mubr.f32.mxu0 0.0
    %1746 = vmatmul.mubr.f32.gmra.mrb[0].mxu0 %v1670
    %v1747 = vpop.f32.mrb[0].mxu0
    %v1748 = vadd.f32 0.0, %v1747
    %v1749 = vpop.f32.mrb[0].mxu0
    %1750 = vmatprep.mubr.f32.mxu0 0.0
    %1751 = vmatmul.mubr.f32.gmra.mrb[0].mxu0 %v1673
    %v1752 = vpop.f32.mrb[0].mxu0
    %v1753 = vadd.f32 0.0, %v1752
    %v1754 = vpop.f32.mrb[0].mxu0
    %1755 = vmatprep.mubr.f32.mxu0 0.0
    %1756 = vmatmul.mubr.f32.gmra.mrb[0].mxu0 %v1676
    %v1757 = vpop.f32.mrb[0].mxu0
    %v1758 = vadd.f32 0.0, %v1757
    %v1759 = vpop.f32.mrb[0].mxu0
    %1760 = vmatprep.mubr.f32.mxu0 0.0
    %1761 = vmatmul.mubr.f32.gmra.mrb[0].mxu0 %v1679
    %v1762 = vpop.f32.mrb[0].mxu0
    %v1763 = vadd.f32 0.0, %v1762
    %v1764 = vpop.f32.mrb[0].mxu0
    %1765 = vdwg.mxu0
    %v1766 = vadd.f32 %v1622, %v1748
    %v1767 = vadd.f32 %v1627, %v1753
    %v1768 = vadd.f32 %v1632, %v1758
    %v1769 = vadd.f32 %v1637, %v1763
    %v1770 = vld [vmem:[%s10] sm:$0xff]
    %v1771 = vld [vmem:[%s10 + $0x8] sm:$0xff]
    %v1772 = vld [vmem:[%s10 + $0x10] sm:$0xff]
    %v1773 = vld [vmem:[%s10 + $0x18] sm:$0xff]
    %1775 = vset.pattern.permute.xlu0 0
    %1776 = vperm.xlu0 %1775, %v1770
    %v1777 = vpop.permute.xlu0 %1776
    %1780 = vset.pattern.permute.xlu0 0
    %1781 = vperm.xlu0 %1780, %v1771
    %v1782 = vpop.permute.xlu0 %1781
    %1785 = vset.pattern.permute.xlu0 0
    %1786 = vperm.xlu0 %1785, %v1772
    %v1787 = vpop.permute.xlu0 %1786
    %1790 = vset.pattern.permute.xlu0 0
    %1791 = vperm.xlu0 %1790, %v1773
    %v1792 = vpop.permute.xlu0 %1791
    %v1794 = vadd.f32 %v1766, %v1777
    %v1795 = vadd.f32 %v1767, %v1782
    %v1796 = vadd.f32 %v1768, %v1787
    %v1797 = vadd.f32 %v1769, %v1792
    %v1798 = vmax.f32 %v1794, 0.0
    %v1799 = vmax.f32 %v1795, 0.0
    %v1800 = vmax.f32 %v1796, 0.0
    %v1801 = vmax.f32 %v1797, 0.0
    %v1802 = vld [vmem:[%s11] sm:$0xff]
    %1803 = vrot.lane.b32.xlu0 %v1798, 1
    %v1804 = vpop.permute.xlu0 %1803
    %1805 = vrot.lane.b32.xlu0 %v1799, 1
    %v1806 = vpop.permute.xlu0 %1805
    %1807 = vrot.lane.b32.xlu0 %v1800, 1
    %v1808 = vpop.permute.xlu0 %1807
    %1809 = vrot.lane.b32.xlu0 %v1801, 1
    %v1810 = vpop.permute.xlu0 %1809
    %v1811 = vsel %vm65, %v1804, 0.0
    %v1812 = vsel %vm65, %v1806, 0.0
    %v1813 = vsel %vm65, %v1808, 0.0
    %v1814 = vsel %vm65, %v1810, 0.0
    %s1815 = scalar_lea.vmem %s11, 8
    %v1816 = vld [vmem:[%s1815] sm:$0xff]
    %v1818 = vsel %vm246, %v1816, 0
    %1820 = vmatprep.subr.mxu0 0.0
    %1821 = vmatpush1.msra.mxu0 %v1798
    %1822 = vmatprep.subr.mxu0 0.0
    %1823 = vmatpush1.msra.mxu0 %v1799
    %1824 = vmatprep.subr.mxu0 0.0
    %1825 = vmatpush1.msra.mxu0 %v1800
    %1826 = vmatprep.subr.mxu0 0.0
    %1827 = vmatpush1.msra.mxu0 %v1801
    %1828 = vmatprep.subr.mxu0 0.0
    %1829 = vmatpush1.msra.mxu0 0.0
    %1830 = vmatprep.subr.mxu0 0.0
    %1831 = vmatpush1.msra.mxu0 0.0
    %1832 = vmatprep.subr.mxu0 0.0
    %1833 = vmatpush1.msra.mxu0 0.0
    %1834 = vmatprep.subr.mxu0 0.0
    %1835 = vmatpush1.msra.mxu0 0.0
    %1836 = vmatprep.subr.mxu0 0.0
    %1837 = vmatpush1.msra.mxu0 0.0
    %1838 = vmatprep.subr.mxu0 0.0
    %1839 = vmatpush1.msra.mxu0 0.0
    %1840 = vmatprep.subr.mxu0 0.0
    %1841 = vmatpush1.msra.mxu0 0.0
    %1842 = vmatprep.subr.mxu0 0.0
    %1843 = vmatpush1.msra.mxu0 0.0
    %1844 = vmatprep.subr.mxu0 0.0
    %1845 = vmatpush1.msra.mxu0 0.0
    %1846 = vmatprep.subr.mxu0 0.0
    %1847 = vmatpush1.msra.mxu0 0.0
    %1848 = vmatprep.subr.mxu0 0.0
    %1849 = vmatpush1.msra.mxu0 0.0
    %1850 = vmatprep.subr.mxu0 0.0
    %1851 = vmatpush1.msra.mxu0 0.0
    %1852 = vmatprep.subr.mxu0 0.0
    %1853 = vmatpush1.msra.mxu0 0.0
    %1854 = vmatprep.subr.mxu0 0.0
    %1855 = vmatpush1.msra.mxu0 0.0
    %1856 = vmatprep.subr.mxu0 0.0
    %1857 = vmatpush1.msra.mxu0 0.0
    %1858 = vmatprep.subr.mxu0 0.0
    %1859 = vmatpush1.msra.mxu0 0.0
    %1860 = vmatprep.subr.mxu0 0.0
    %1861 = vmatpush1.msra.mxu0 0.0
    %1862 = vmatprep.subr.mxu0 0.0
    %1863 = vmatpush1.msra.mxu0 0.0
    %1864 = vmatprep.subr.mxu0 0.0
    %1865 = vmatpush1.msra.mxu0 0.0
    %1866 = vmatprep.subr.mxu0 0.0
    %1867 = vmatpush1.msra.mxu0 0.0
    %1868 = vmatprep.subr.mxu0 0.0
    %1869 = vmatpush1.msra.mxu0 0.0
    %1870 = vmatprep.subr.mxu0 0.0
    %1871 = vmatpush1.msra.mxu0 0.0
    %1872 = vmatprep.subr.mxu0 0.0
    %1873 = vmatpush1.msra.mxu0 0.0
    %1874 = vmatprep.subr.mxu0 0.0
    %1875 = vmatpush1.msra.mxu0 0.0
    %1876 = vmatprep.subr.mxu0 0.0
    %1877 = vmatpush1.msra.mxu0 0.0
    %1878 = vmatprep.subr.mxu0 0.0
    %1879 = vmatpush1.msra.mxu0 0.0
    %1880 = vmatprep.subr.mxu0 0.0
    %1881 = vmatpush1.msra.mxu0 0.0
    %1882 = vmatprep.subr.mxu0 0.0
    %1883 = vmatpush1.msra.mxu0 0.0
    %1884 = vmatprep.mubr.f32.mxu0 0.0
    %1885 = vmatmul.mubr.f32.gmra.mrb[0].mxu0 %v1818
    %v1886 = vpop.f32.mrb[0].mxu0
    %v1887 = vadd.f32 0.0, %v1886
    %v1888 = vpop.f32.mrb[0].mxu0
    %1889 = vdwg.mxu0
    %v1891 = vsel %vm246, %v1802, 0
    %1893 = vmatprep.subr.mxu0 0.0
    %1894 = vmatpush1.msra.mxu0 %v1811
    %1895 = vmatprep.subr.mxu0 0.0
    %1896 = vmatpush1.msra.mxu0 %v1812
    %1897 = vmatprep.subr.mxu0 0.0
    %1898 = vmatpush1.msra.mxu0 %v1813
    %1899 = vmatprep.subr.mxu0 0.0
    %1900 = vmatpush1.msra.mxu0 %v1814
    %1901 = vmatprep.subr.mxu0 0.0
    %1902 = vmatpush1.msra.mxu0 0.0
    %1903 = vmatprep.subr.mxu0 0.0
    %1904 = vmatpush1.msra.mxu0 0.0
    %1905 = vmatprep.subr.mxu0 0.0
    %1906 = vmatpush1.msra.mxu0 0.0
    %1907 = vmatprep.subr.mxu0 0.0
    %1908 = vmatpush1.msra.mxu0 0.0
    %1909 = vmatprep.subr.mxu0 0.0
    %1910 = vmatpush1.msra.mxu0 0.0
    %1911 = vmatprep.subr.mxu0 0.0
    %1912 = vmatpush1.msra.mxu0 0.0
    %1913 = vmatprep.subr.mxu0 0.0
    %1914 = vmatpush1.msra.mxu0 0.0
    %1915 = vmatprep.subr.mxu0 0.0
    %1916 = vmatpush1.msra.mxu0 0.0
    %1917 = vmatprep.subr.mxu0 0.0
    %1918 = vmatpush1.msra.mxu0 0.0
    %1919 = vmatprep.subr.mxu0 0.0
    %1920 = vmatpush1.msra.mxu0 0.0
    %1921 = vmatprep.subr.mxu0 0.0
    %1922 = vmatpush1.msra.mxu0 0.0
    %1923 = vmatprep.subr.mxu0 0.0
    %1924 = vmatpush1.msra.mxu0 0.0
    %1925 = vmatprep.subr.mxu0 0.0
    %1926 = vmatpush1.msra.mxu0 0.0
    %1927 = vmatprep.subr.mxu0 0.0
    %1928 = vmatpush1.msra.mxu0 0.0
    %1929 = vmatprep.subr.mxu0 0.0
    %1930 = vmatpush1.msra.mxu0 0.0
    %1931 = vmatprep.subr.mxu0 0.0
    %1932 = vmatpush1.msra.mxu0 0.0
    %1933 = vmatprep.subr.mxu0 0.0
    %1934 = vmatpush1.msra.mxu0 0.0
    %1935 = vmatprep.subr.mxu0 0.0
    %1936 = vmatpush1.msra.mxu0 0.0
    %1937 = vmatprep.subr.mxu0 0.0
    %1938 = vmatpush1.msra.mxu0 0.0
    %1939 = vmatprep.subr.mxu0 0.0
    %1940 = vmatpush1.msra.mxu0 0.0
    %1941 = vmatprep.subr.mxu0 0.0
    %1942 = vmatpush1.msra.mxu0 0.0
    %1943 = vmatprep.subr.mxu0 0.0
    %1944 = vmatpush1.msra.mxu0 0.0
    %1945 = vmatprep.subr.mxu0 0.0
    %1946 = vmatpush1.msra.mxu0 0.0
    %1947 = vmatprep.subr.mxu0 0.0
    %1948 = vmatpush1.msra.mxu0 0.0
    %1949 = vmatprep.subr.mxu0 0.0
    %1950 = vmatpush1.msra.mxu0 0.0
    %1951 = vmatprep.subr.mxu0 0.0
    %1952 = vmatpush1.msra.mxu0 0.0
    %1953 = vmatprep.subr.mxu0 0.0
    %1954 = vmatpush1.msra.mxu0 0.0
    %1955 = vmatprep.subr.mxu0 0.0
    %1956 = vmatpush1.msra.mxu0 0.0
    %1957 = vmatprep.mubr.f32.mxu0 0.0
    %1958 = vmatmul.mubr.f32.gmra.mrb[0].mxu0 %v1891
    %v1959 = vpop.f32.mrb[0].mxu0
    %v1960 = vadd.f32 %v1887, %v1959
    %v1961 = vpop.f32.mrb[0].mxu0
    %1962 = vdwg.mxu0
    %s1963 = scalar_lea.vmem %s11, 16
    %v1964 = vld [vmem:[%s1963] sm:$0xff]
    %1965 = vrot.lane.b32.xlu0 %v1798, 127
    %v1966 = vpop.permute.xlu0 %1965
    %1967 = vrot.lane.b32.xlu0 %v1799, 127
    %v1968 = vpop.permute.xlu0 %1967
    %1969 = vrot.lane.b32.xlu0 %v1800, 127
    %v1970 = vpop.permute.xlu0 %1969
    %1971 = vrot.lane.b32.xlu0 %v1801, 127
    %v1972 = vpop.permute.xlu0 %1971
    %v1973 = vsel %vm67, %v1966, 0.0
    %v1974 = vsel %vm67, %v1968, 0.0
    %v1975 = vsel %vm67, %v1970, 0.0
    %v1976 = vsel %vm67, %v1972, 0.0
    %v1978 = vsel %vm246, %v1964, 0
    %1980 = vmatprep.subr.mxu0 0.0
    %1981 = vmatpush1.msra.mxu0 %v1973
    %1982 = vmatprep.subr.mxu0 0.0
    %1983 = vmatpush1.msra.mxu0 %v1974
    %1984 = vmatprep.subr.mxu0 0.0
    %1985 = vmatpush1.msra.mxu0 %v1975
    %1986 = vmatprep.subr.mxu0 0.0
    %1987 = vmatpush1.msra.mxu0 %v1976
    %1988 = vmatprep.subr.mxu0 0.0
    %1989 = vmatpush1.msra.mxu0 0.0
    %1990 = vmatprep.subr.mxu0 0.0
    %1991 = vmatpush1.msra.mxu0 0.0
    %1992 = vmatprep.subr.mxu0 0.0
    %1993 = vmatpush1.msra.mxu0 0.0
    %1994 = vmatprep.subr.mxu0 0.0
    %1995 = vmatpush1.msra.mxu0 0.0
    %1996 = vmatprep.subr.mxu0 0.0
    %1997 = vmatpush1.msra.mxu0 0.0
    %1998 = vmatprep.subr.mxu0 0.0
    %1999 = vmatpush1.msra.mxu0 0.0
    %2000 = vmatprep.subr.mxu0 0.0
    %2001 = vmatpush1.msra.mxu0 0.0
    %2002 = vmatprep.subr.mxu0 0.0
    %2003 = vmatpush1.msra.mxu0 0.0
    %2004 = vmatprep.subr.mxu0 0.0
    %2005 = vmatpush1.msra.mxu0 0.0
    %2006 = vmatprep.subr.mxu0 0.0
    %2007 = vmatpush1.msra.mxu0 0.0
    %2008 = vmatprep.subr.mxu0 0.0
    %2009 = vmatpush1.msra.mxu0 0.0
    %2010 = vmatprep.subr.mxu0 0.0
    %2011 = vmatpush1.msra.mxu0 0.0
    %2012 = vmatprep.subr.mxu0 0.0
    %2013 = vmatpush1.msra.mxu0 0.0
    %2014 = vmatprep.subr.mxu0 0.0
    %2015 = vmatpush1.msra.mxu0 0.0
    %2016 = vmatprep.subr.mxu0 0.0
    %2017 = vmatpush1.msra.mxu0 0.0
    %2018 = vmatprep.subr.mxu0 0.0
    %2019 = vmatpush1.msra.mxu0 0.0
    %2020 = vmatprep.subr.mxu0 0.0
    %2021 = vmatpush1.msra.mxu0 0.0
    %2022 = vmatprep.subr.mxu0 0.0
    %2023 = vmatpush1.msra.mxu0 0.0
    %2024 = vmatprep.subr.mxu0 0.0
    %2025 = vmatpush1.msra.mxu0 0.0
    %2026 = vmatprep.subr.mxu0 0.0
    %2027 = vmatpush1.msra.mxu0 0.0
    %2028 = vmatprep.subr.mxu0 0.0
    %2029 = vmatpush1.msra.mxu0 0.0
    %2030 = vmatprep.subr.mxu0 0.0
    %2031 = vmatpush1.msra.mxu0 0.0
    %2032 = vmatprep.subr.mxu0 0.0
    %2033 = vmatpush1.msra.mxu0 0.0
    %2034 = vmatprep.subr.mxu0 0.0
    %2035 = vmatpush1.msra.mxu0 0.0
    %2036 = vmatprep.subr.mxu0 0.0
    %2037 = vmatpush1.msra.mxu0 0.0
    %2038 = vmatprep.subr.mxu0 0.0
    %2039 = vmatpush1.msra.mxu0 0.0
    %2040 = vmatprep.subr.mxu0 0.0
    %2041 = vmatpush1.msra.mxu0 0.0
    %2042 = vmatprep.subr.mxu0 0.0
    %2043 = vmatpush1.msra.mxu0 0.0
    %2044 = vmatprep.mubr.f32.mxu0 0.0
    %2045 = vmatmul.mubr.f32.gmra.mrb[0].mxu0 %v1978
    %v2046 = vpop.f32.mrb[0].mxu0
    %v2047 = vadd.f32 0.0, %v2046
    %v2048 = vpop.f32.mrb[0].mxu0
    %2049 = vdwg.mxu0
    %v2050 = vadd.f32 %v1960, %v2047
    %v2051 = vld [vmem:[#allocation2] sm:$0x1]
    %2053 = vset.pattern.permute.xlu0 0
    %2054 = vperm.xlu0 %2053, %v2051
    %v2055 = vpop.permute.xlu0 %2054
    %v2057 = vlaneseq
    %v2058 = vshrl.u32 %v2057, 7
    %v2059 = vsub.s32 0, %v2058
    %v2060 = vrot.slane %v2055, %v2059
    %v2061 = vadd.f32 %v2050, %v2060
    %2062 = vst [vmem:[#allocation3] sm:$0x1] %v2061
    // Predicated region
    $region54: #{tpu_custom_call.1} parent=1 // pred_check
      _
    $region55: #{tpu_custom_call.1} parent=1 // pred_check_branch
      %2064 = sbr.rel (0) target = $region57
    $region56: #{tpu_custom_call.1} parent=1 // pred_region
      %s2066 = ssub.s32 16, 16
      %2067 = vsyncadd [#allocation4], %s2066
      %s2069 = sshll.u32 [#allocation3], 4
      %s2070 = int_to_ptr.vmem [resolvable:$true] %s2069
      %2072 = dma.vmem_to_hbm [thread:$0]  %s2070, 16, %s13, [#allocation4]
    $region57: #{tpu_custom_call.1} parent=1 // pred_fallthru
      _
    // Predicated region
    $region58: #{tpu_custom_call.1} parent=1 // pred_check
      _
    $region59: #{tpu_custom_call.1} parent=1 // pred_check_branch
      %2074 = sbr.rel (0) target = $region61
    $region60: #{tpu_custom_call.1} parent=1 // pred_region
      %2075 = dma.done [#allocation4], 16
    $region61: #{tpu_custom_call.1} parent=1 // pred_fallthru
      _
    %2076 = vsyncpa [#allocation4], 1

</llo_original>
